<compile_context>
chip_gen: v7x
topology: tpu7x:2x2x1
jax: 0.10.0
libtpu: 0.0.40
codegen_flags: <defaults>
</compile_context>

<pallas_src>
import functools

import jax
import jax.numpy as jnp
from jax import lax
from jax.experimental import pallas as pl
from jax.experimental.pallas import tpu as pltpu

NEG_INF = -1e9

# ---------------------------------------------------------------------------
# Packed vector-parameter table layout: shape (VEC_ROWS, 128) f32.
# Each row holds one (or several concatenated) small vectors in its leading
# lanes.  Requires 4H <= 128, F <= 128, V <= 128 (true at the toy sizes here).
# ---------------------------------------------------------------------------
ROW_ATTN_B = 0    # rows 0..2 : [bq | bk | bv | bo]        width 4H   (attn 0..2)
ROW_ATTN_LN = 3   # rows 3..5 : [ln_g | ln_b]              width 2H
ROW_FFN_B1 = 6    # rows 6..7 : b1                         width F    (ffn 0..1)
ROW_FFN_V = 8     # rows 8..9 : [b2 | ln_g | ln_b]         width 3H
ROW_FLB = 10      # row 10    : final_logits_bias          width V
ROW_CLS = 11      # row 11    : [cls_w | cls_b]            width H+1
VEC_ROWS = 16
VEC_LANES = 128


def _round_up(x, m):
    return ((x + m - 1) // m) * m


# ---------------------------------------------------------------------------
# In-kernel building blocks (traced inline inside the fused kernel)
# ---------------------------------------------------------------------------
def _ln(h, g, b, eps=1e-5):
    mu = jnp.mean(h, axis=-1, keepdims=True)
    var = jnp.mean((h - mu) ** 2, axis=-1, keepdims=True)
    return (h - mu) * lax.rsqrt(var + eps) * g + b


def _pad_rows(x, rows):
    n = x.shape[0]
    if n == rows:
        return x
    return jnp.concatenate([x, jnp.zeros((rows - n, x.shape[1]), x.dtype)], axis=0)


def _sdpa(q, k, v, bias, b, tq, tk):
    """Batched single-head scaled-dot-product attention on flattened slabs."""
    h = q.shape[-1]
    q3 = q.reshape(b, tq, h).astype(jnp.bfloat16)
    k3 = k.reshape(b, tk, h).astype(jnp.bfloat16)
    v3 = v.reshape(b, tk, h).astype(jnp.bfloat16)
    scale = 1.0 / float(h) ** 0.5
    scores = jnp.einsum("bqd,bkd->bqk", q3, k3,
                        preferred_element_type=jnp.float32) * scale + bias
    m = jnp.max(scores, axis=-1, keepdims=True)
    p = jnp.exp(scores - m)
    denom = jnp.maximum(jnp.sum(p, axis=-1, keepdims=True), 1e-20)  # NaN guard
    p = p * pl.reciprocal(denom, approx=True)       # EUP slot; ~free
    ctx = jnp.einsum("bqk,bkd->bqd", p.astype(jnp.bfloat16), v3,
                     preferred_element_type=jnp.float32)
    return ctx.reshape(b * tq, h)


def _attn_block(x, mem, bias, b, tq, tk, attn_w_ref, vec_ref, li, self_attn):
    """Single-head attention + residual + LayerNorm with packed [wq|wk|wv|wo]."""
    h = x.shape[-1]
    w = attn_w_ref[li]                                         # (H, 4H) bf16
    brow = vec_ref[ROW_ATTN_B + li:ROW_ATTN_B + li + 1, :]     # (1, 128)
    lrow = vec_ref[ROW_ATTN_LN + li:ROW_ATTN_LN + li + 1, :]   # (1, 128)
    xb = x.astype(jnp.bfloat16)
    if self_attn:
        # one fused x @ [wq|wk|wv] MXU push instead of three
        qkv = jnp.dot(xb, w[:, 0:3 * h],
                      preferred_element_type=jnp.float32) + brow[:, 0:3 * h]
        q = qkv[:, 0:h]
        k = qkv[:, h:2 * h]
        v = qkv[:, 2 * h:3 * h]
    else:
        memb = mem.astype(jnp.bfloat16)
        q = jnp.dot(xb, w[:, 0:h],
                    preferred_element_type=jnp.float32) + brow[:, 0:h]
        kv = jnp.dot(memb, w[:, h:3 * h],                       # fused K/V
                     preferred_element_type=jnp.float32) + brow[:, h:3 * h]
        k = kv[:, 0:h]
        v = kv[:, h:2 * h]
    ctx = _sdpa(q, k, v, bias, b, tq, tk)
    out = jnp.dot(ctx.astype(jnp.bfloat16), w[:, 3 * h:4 * h],
                  preferred_element_type=jnp.float32) + brow[:, 3 * h:4 * h]
    return _ln(x + out, lrow[:, 0:h], lrow[:, h:2 * h])


def _ffn_block(x, ffn_w1_ref, ffn_w2_ref, vec_ref, li):
    """FFN (gelu) + residual + LayerNorm."""
    h = x.shape[-1]
    w1 = ffn_w1_ref[li]                                        # (H, F) bf16
    w2 = ffn_w2_ref[li]                                        # (F, H) bf16
    f = w1.shape[-1]
    b1 = vec_ref[ROW_FFN_B1 + li:ROW_FFN_B1 + li + 1, :][:, 0:f]
    vrow = vec_ref[ROW_FFN_V + li:ROW_FFN_V + li + 1, :]       # [b2 | g | b]
    y = jnp.dot(x.astype(jnp.bfloat16), w1,
                preferred_element_type=jnp.float32) + b1
    # TODO(synk): HF BART uses exact (erf) GELU; tanh approximation used here.
    y = jax.nn.gelu(y)
    y = jnp.dot(y.astype(jnp.bfloat16), w2,
                preferred_element_type=jnp.float32) + vrow[:, 0:h]
    return _ln(x + y, vrow[:, h:2 * h], vrow[:, 2 * h:3 * h])


# ---------------------------------------------------------------------------
# Fused kernel: one batch-block (whole batch, or half of it on v7x) per step
# ---------------------------------------------------------------------------
def _fused_forward_kernel(enc_emb_ref, dec_emb_ref, enc_mask_ref, dec_mask_ref,
                          labels_ref, attn_w_ref, ffn_w1_ref, ffn_w2_ref,
                          embed_ref, vec_ref,
                          enc_out_ref, logits_ref, aux_ref):
    bb, s, h = enc_emb_ref.shape
    t = dec_emb_ref.shape[1]
    v = embed_ref.shape[0]
    ne = bb * s
    nd = bb * t
    r = aux_ref.shape[0]

    enc_x = enc_emb_ref[...].reshape(ne, h)          # (Bb*S, H) f32
    dec_x = dec_emb_ref[...].reshape(nd, h)          # (Bb*T, H) f32
    enc_key = enc_mask_ref[...]                      # (Bb, 1, S) in {0,1}
    dec_key = dec_mask_ref[...]                      # (Bb, 1, T) in {0,1}

    # attention biases built in-kernel from O(S) masks
    enc_bias = (1.0 - enc_key) * NEG_INF             # (Bb, 1, S)
    row = lax.broadcasted_iota(jnp.int32, (t, t), 0)
    col = lax.broadcasted_iota(jnp.int32, (t, t), 1)
    allowed = (row >= col)[None, :, :] & (dec_key > 0.5)
    dec_bias = jnp.where(allowed, 0.0, NEG_INF)      # (Bb, T, T)

    # ------------------------------ encoder -------------------------------
    enc_h = _attn_block(enc_x, enc_x, enc_bias, bb, s, s,
                        attn_w_ref, vec_ref, 0, True)
    enc_h = _ffn_block(enc_h, ffn_w1_ref, ffn_w2_ref, vec_ref, 0)
    enc_out_ref[...] = enc_h.reshape(bb, s, h).astype(enc_out_ref.dtype)

    # classification head: VPU multiply + XLU reduce (no output-width-1 matmul)
    clsrow = vec_ref[ROW_CLS:ROW_CLS + 1, :]
    cls_w = clsrow[:, 0:h]                           # (1, H)
    cls_b = clsrow[:, h:h + 1]                       # (1, 1)
    cls_sig = jax.nn.sigmoid(
        jnp.sum(enc_h * cls_w, axis=-1, keepdims=True) + cls_b)   # (Bb*S, 1)

    # ------------------------------ decoder -------------------------------
    dec_h = _attn_block(dec_x, dec_x, dec_bias, bb, t, t,
                        attn_w_ref, vec_ref, 1, True)
    dec_h = _attn_block(dec_h, enc_h, enc_bias, bb, t, s,
                        attn_w_ref, vec_ref, 2, False)        # cross-attn
    dec_h = _ffn_block(dec_h, ffn_w1_ref, ffn_w2_ref, vec_ref, 1)

    # ----------------- tied LM head: contract on H of (V, H) --------------
    # TODO(synk): at real BART sizes (V~50k, H=768) embed_tokens must be tiled
    #             over a vocab grid axis with an online logsumexp instead of
    #             residing whole in VMEM; fine at V=64.
    logits = lax.dot_general(
        dec_h.astype(jnp.bfloat16), embed_ref[...],
        (((1,), (1,)), ((), ())),
        preferred_element_type=jnp.float32)
    logits = logits + vec_ref[ROW_FLB:ROW_FLB + 1, :][:, 0:v]
    logits_ref[...] = logits.reshape(bb, t, v).astype(logits_ref.dtype)

    # ----------------- fused per-token CE stats (ignore_index = -100) ------
    lab = labels_ref[...].reshape(nd, 1)                          # int32
    valid = (lab != -100).astype(jnp.float32)                     # (Bb*T, 1)
    m = jnp.max(logits, axis=-1, keepdims=True)
    lse = jnp.log(jnp.sum(jnp.exp(logits - m), axis=-1, keepdims=True)) + m
    vocab_ids = lax.broadcasted_iota(jnp.int32, (nd, v), 1)
    picked = jnp.sum(jnp.where(vocab_ids == lab, logits, 0.0),
                     axis=-1, keepdims=True)
    nll = (lse - picked) * valid                                  # (Bb*T, 1)

    # ----------------- lane-dense aux output: one (R, 128) tile ------------
    # col 0 = sigmoid(cls) per encoder token, col 1 = per-token nll,
    # col 2 = valid flag; padding rows/lanes are zero.
    lane = lax.broadcasted_iota(jnp.int32, (r, VEC_LANES), 1)
    aux = jnp.where(lane == 0, _pad_rows(cls_sig, r),
          jnp.where(lane == 1, _pad_rows(nll, r),
          jnp.where(lane == 2, _pad_rows(valid, r), 0.0)))
    aux_ref[...] = aux


# ---------------------------------------------------------------------------
# pallas_call wrapper
# ---------------------------------------------------------------------------
def _batch_split(batch):
    """v7x has 2 TensorCores -> 2 grid steps; v5e/v6e -> single step."""
    kind = jax.devices()[0].device_kind.lower()
    two_core = ("v7" in kind) or ("7x" in kind)
    if two_core and batch >= 2 and batch % 2 == 0:
        return 2, batch // 2
    return 1, batch


def fused_forward(params, enc_emb, dec_emb, enc_mask, dec_mask, labels,
                  n_blk, r_blk):
    B, S, H = enc_emb.shape
    T = dec_emb.shape[1]
    V = params["embed_tokens"].shape[0]
    Bb = B // n_blk

    enc_mask3 = enc_mask.astype(jnp.float32)[:, None, :]   # (B, 1, S)
    dec_mask3 = dec_mask.astype(jnp.float32)[:, None, :]   # (B, 1, T)
    labels3 = labels.astype(jnp.int32)[:, :, None]         # (B, T, 1)

    def batched(shape):
        nd = len(shape)
        return pl.BlockSpec((Bb,) + tuple(shape[1:]),
                            lambda i, _nd=nd: (i,) + (0,) * (_nd - 1))

    def resident(shape):
        nd = len(shape)
        return pl.BlockSpec(tuple(shape), lambda i, _nd=nd: (0,) * _nd)

    args = (enc_emb, dec_emb, enc_mask3, dec_mask3, labels3,
            params["attn_w"], params["ffn_w1"], params["ffn_w2"],
            params["embed_tokens"], params["vec"])

    in_specs = [batched(enc_emb.shape), batched(dec_emb.shape),
                batched(enc_mask3.shape), batched(dec_mask3.shape),
                batched(labels3.shape)]
    in_specs += [resident(a.shape) for a in args[5:]]

    out_shape = (
        jax.ShapeDtypeStruct((B, S, H), jnp.float32),            # encoder hidden
        jax.ShapeDtypeStruct((B, T, V), jnp.float32),            # lm logits
        jax.ShapeDtypeStruct((n_blk * r_blk, VEC_LANES), jnp.float32),  # aux
    )
    out_specs = (
        pl.BlockSpec((Bb, S, H), lambda i: (i, 0, 0)),
        pl.BlockSpec((Bb, T, V), lambda i: (i, 0, 0)),
        pl.BlockSpec((r_blk, VEC_LANES), lambda i: (i, 0)),
    )

    return pl.pallas_call(
        _fused_forward_kernel,
        out_shape=out_shape,
        grid=(n_blk,),
        in_specs=in_specs,
        out_specs=out_specs,
        compiler_params=pltpu.CompilerParams(
            dimension_semantics=("parallel",),
            vmem_limit_bytes=32 * 1024 * 1024),
    )(*args)


# ---------------------------------------------------------------------------
# Plain-JAX glue (embedding lookup + final scalar loss division)
# ---------------------------------------------------------------------------
def _layer_norm(x, g, b, eps=1e-5):
    mu = jnp.mean(x, -1, keepdims=True)
    var = jnp.mean((x - mu) ** 2, -1, keepdims=True)
    return (x - mu) * lax.rsqrt(var + eps) * g + b


def _embed(params, ids):
    tok = jnp.take(params["embed_tokens"], ids, axis=0).astype(jnp.float32)
    pos = params["embed_positions"][: ids.shape[1]][None]
    return _layer_norm(tok + pos, params["emb_ln_g"], params["emb_ln_b"])


def forward(params, input_ids, attention_mask, decoder_input_ids,
            decoder_attention_mask, abs_labels):
    enc_emb = _embed(params, input_ids)
    dec_emb = _embed(params, decoder_input_ids)
    B, S, _ = enc_emb.shape
    T = dec_emb.shape[1]

    n_blk, Bb = _batch_split(B)
    r_blk = _round_up(max(Bb * S, Bb * T), 8)

    enc_out, logits, aux = fused_forward(
        params, enc_emb, dec_emb, attention_mask, decoder_attention_mask,
        abs_labels, n_blk, r_blk)

    aux = aux.reshape(n_blk, r_blk, VEC_LANES)
    cls_out = aux[:, :Bb * S, 0].reshape(B, S, 1)

    # seq2seq CE loss (ignore_index = -100): only the scalar division is glue.
    nll_sum = jnp.sum(aux[:, :, 1])
    n_valid = jnp.sum(aux[:, :, 2])
    loss = nll_sum / jnp.maximum(n_valid, 1.0)

    outputs = {
        "loss": loss,
        "logits": logits,
        "encoder_last_hidden_state": enc_out,
    }
    return outputs, cls_out


# ---------------------------------------------------------------------------
# Deterministic packed-parameter init
# ---------------------------------------------------------------------------
def init_params(key, H=32, F=64, V=64, max_pos=64):
    assert 4 * H <= VEC_LANES and F <= VEC_LANES and V <= VEC_LANES
    keys = iter(jax.random.split(key, 8))

    def dense(shape, scale=0.02, dtype=jnp.float32):
        return (jax.random.normal(next(keys), shape, jnp.float32) * scale).astype(dtype)

    # Attention layers: 0 = enc self, 1 = dec self, 2 = dec cross.
    attn_w = dense((3, H, 4 * H), dtype=jnp.bfloat16)        # [wq|wk|wv|wo]
    # FFN layers: 0 = encoder, 1 = decoder.
    ffn_w1 = dense((2, H, F), dtype=jnp.bfloat16)
    ffn_w2 = dense((2, F, H), dtype=jnp.bfloat16)
    embed_tokens = dense((V, H), dtype=jnp.bfloat16)         # tied LM head (V, H)
    embed_positions = dense((max_pos, H))
    cls_w = dense((H,))                                      # nn.Linear(hidden, 1)

    vec = jnp.zeros((VEC_ROWS, VEC_LANES), jnp.float32)
    for li in range(3):                                      # attention LN gamma = 1
        vec = vec.at[ROW_ATTN_LN + li, 0:H].set(1.0)
    for li in range(2):                                      # ffn LN gamma = 1
        vec = vec.at[ROW_FFN_V + li, H:2 * H].set(1.0)
    vec = vec.at[ROW_CLS, 0:H].set(cls_w)                    # cls weight; cls bias = 0
    # attn/ffn biases and final_logits_bias stay 0 (matches fresh nn.Linear bias=0-ish init)

    return dict(
        embed_tokens=embed_tokens,
        embed_positions=embed_positions,
        emb_ln_g=jnp.ones((1, H), jnp.float32),
        emb_ln_b=jnp.zeros((1, H), jnp.float32),
        attn_w=attn_w, ffn_w1=ffn_w1, ffn_w2=ffn_w2,
        vec=vec,
    )


# ---------------------------------------------------------------------------
if __name__ == "__main__":
    B, S_ENC, T_DEC, H, F, V = 2, 8, 8, 32, 64, 64

    key = jax.random.PRNGKey(0)
    kp, k1, k2, k3 = jax.random.split(key, 4)
    params = init_params(kp, H=H, F=F, V=V, max_pos=64)

    input_ids = jax.random.randint(k1, (B, S_ENC), 0, V, dtype=jnp.int32)
    attention_mask = jnp.ones((B, S_ENC), jnp.int32).at[1, S_ENC - 2:].set(0)
    decoder_input_ids = jax.random.randint(k2, (B, T_DEC), 0, V, dtype=jnp.int32)
    decoder_attention_mask = jnp.ones((B, T_DEC), jnp.int32)
    abs_labels = jax.random.randint(k3, (B, T_DEC), 0, V, dtype=jnp.int32)
    abs_labels = abs_labels.at[0, 0].set(-100)   # exercise ignore_index

    fwd = jax.jit(functools.partial(forward, params))
    outputs, encoder_classified_tokens = fwd(
        input_ids, attention_mask, decoder_input_ids,
        decoder_attention_mask, abs_labels)

    jax.block_until_ready((outputs, encoder_classified_tokens))

    assert outputs["encoder_last_hidden_state"].shape == (B, S_ENC, H)
    assert outputs["logits"].shape == (B, T_DEC, V)
    assert encoder_classified_tokens.shape == (B, S_ENC, 1)
    assert bool(jnp.isfinite(outputs["loss"]))
    assert bool(jnp.all(jnp.isfinite(outputs["logits"])))
    assert bool(jnp.all(jnp.isfinite(encoder_classified_tokens)))
    assert bool(jnp.all((encoder_classified_tokens >= 0) & (encoder_classified_tokens <= 1)))

    print("KERNEL_OK")
</pallas_src>

<mosaic_0001>
module attributes {stable_mosaic.version = 11 : i64} {
  func.func @_fused_forward_kernel(%arg0: i32, %arg1: memref<2x8x32xf32, #tpu.memory_space<vmem>>, %arg2: memref<2x8x32xf32, #tpu.memory_space<vmem>>, %arg3: memref<2x1x8xf32, #tpu.memory_space<vmem>>, %arg4: memref<2x1x8xf32, #tpu.memory_space<vmem>>, %arg5: memref<2x8x1xi32, #tpu.memory_space<vmem>>, %arg6: memref<3x32x128xbf16, #tpu.memory_space<vmem>>, %arg7: memref<2x32x64xbf16, #tpu.memory_space<vmem>>, %arg8: memref<2x64x32xbf16, #tpu.memory_space<vmem>>, %arg9: memref<64x32xbf16, #tpu.memory_space<vmem>>, %arg10: memref<16x128xf32, #tpu.memory_space<vmem>>, %arg11: memref<2x8x32xf32, #tpu.memory_space<vmem>>, %arg12: memref<2x8x64xf32, #tpu.memory_space<vmem>>, %arg13: memref<16x128xf32, #tpu.memory_space<vmem>>) attributes {dimension_semantics = [#tpu.dimension_semantics<parallel>], iteration_bounds = array<i64: 1>, scalar_prefetch = 0 : i64, scratch_operands = 0 : i64, tpu.core_type = #tpu.core_type<tc>, window_params = [{transform_indices = @transform_0, window_bounds = array<i64: 2, 8, 32>}, {transform_indices = @transform_1, window_bounds = array<i64: 2, 8, 32>}, {transform_indices = @transform_2, window_bounds = array<i64: 2, 1, 8>}, {transform_indices = @transform_3, window_bounds = array<i64: 2, 1, 8>}, {transform_indices = @transform_4, window_bounds = array<i64: 2, 8, 1>}, {pipeline_mode = #tpu.pipeline_mode<synchronous>, transform_indices = @transform_5, window_bounds = array<i64: 3, 32, 128>}, {pipeline_mode = #tpu.pipeline_mode<synchronous>, transform_indices = @transform_6, window_bounds = array<i64: 2, 32, 64>}, {pipeline_mode = #tpu.pipeline_mode<synchronous>, transform_indices = @transform_7, window_bounds = array<i64: 2, 64, 32>}, {pipeline_mode = #tpu.pipeline_mode<synchronous>, transform_indices = @transform_8, window_bounds = array<i64: 64, 32>}, {pipeline_mode = #tpu.pipeline_mode<synchronous>, transform_indices = @transform_9, window_bounds = array<i64: 16, 128>}, {transform_indices = @transform_10, window_bounds = array<i64: 2, 8, 32>}, {transform_indices = @transform_11, window_bounds = array<i64: 2, 8, 64>}, {transform_indices = @transform_12, window_bounds = array<i64: 16, 128>}]} {
    %c0 = arith.constant 0 : index
    %c0_0 = arith.constant 0 : index
    %c0_1 = arith.constant 0 : index
    %0 = vector.load %arg1[%c0, %c0_0, %c0_1] : memref<2x8x32xf32, #tpu.memory_space<vmem>>, vector<2x8x32xf32>
    %1 = vector.shape_cast %0 : vector<2x8x32xf32> to vector<16x32xf32>
    %c0_2 = arith.constant 0 : index
    %c0_3 = arith.constant 0 : index
    %c0_4 = arith.constant 0 : index
    %2 = vector.load %arg2[%c0_2, %c0_3, %c0_4] : memref<2x8x32xf32, #tpu.memory_space<vmem>>, vector<2x8x32xf32>
    %3 = vector.shape_cast %2 : vector<2x8x32xf32> to vector<16x32xf32>
    %c0_5 = arith.constant 0 : index
    %c0_6 = arith.constant 0 : index
    %c0_7 = arith.constant 0 : index
    %4 = vector.load %arg3[%c0_5, %c0_6, %c0_7] : memref<2x1x8xf32, #tpu.memory_space<vmem>>, vector<2x1x8xf32>
    %c0_8 = arith.constant 0 : index
    %c0_9 = arith.constant 0 : index
    %c0_10 = arith.constant 0 : index
    %5 = vector.load %arg4[%c0_8, %c0_9, %c0_10] : memref<2x1x8xf32, #tpu.memory_space<vmem>>, vector<2x1x8xf32>
    %cst = arith.constant 1.000000e+00 : f32
    %6 = vector.broadcast %cst : f32 to vector<2x1x8xf32>
    %7 = arith.subf %6, %4 : vector<2x1x8xf32>
    %cst_11 = arith.constant -1.000000e+09 : f32
    %8 = vector.broadcast %cst_11 : f32 to vector<2x1x8xf32>
    %9 = arith.mulf %7, %8 : vector<2x1x8xf32>
    %10 = tpu.iota {dimensions = array<i32: 0>} : vector<8x8xi32>
    %11 = tpu.iota {dimensions = array<i32: 1>} : vector<8x8xi32>
    %12 = arith.cmpi sge, %10, %11 : vector<8x8xi32>
    %13 = vector.shape_cast %12 : vector<8x8xi1> to vector<1x8x8xi1>
    %cst_12 = arith.constant 5.000000e-01 : f32
    %14 = vector.broadcast %cst_12 : f32 to vector<2x1x8xf32>
    %15 = arith.cmpf ogt, %5, %14 : vector<2x1x8xf32>
    %16 = vector.broadcast %13 : vector<1x8x8xi1> to vector<2x8x8xi1>
    %17 = vector.broadcast %15 : vector<2x1x8xi1> to vector<2x8x8xi1>
    %18 = arith.andi %16, %17 : vector<2x8x8xi1>
    %cst_13 = arith.constant 0.000000e+00 : f32
    %cst_14 = arith.constant -1.000000e+09 : f32
    %19 = vector.broadcast %cst_13 : f32 to vector<2x8x8xf32>
    %20 = vector.broadcast %cst_14 : f32 to vector<2x8x8xf32>
    %21 = arith.select %18, %19, %20 : vector<2x8x8xi1>, vector<2x8x8xf32>
    %c0_15 = arith.constant 0 : index
    %c0_16 = arith.constant 0 : index
    %c0_17 = arith.constant 0 : index
    %22 = vector.load %arg6[%c0_15, %c0_16, %c0_17] : memref<3x32x128xbf16, #tpu.memory_space<vmem>>, vector<1x32x128xbf16>
    %23 = vector.shape_cast %22 : vector<1x32x128xbf16> to vector<32x128xbf16>
    %c0_18 = arith.constant 0 : index
    %c0_19 = arith.constant 0 : index
    %24 = vector.load %arg10[%c0_18, %c0_19] : memref<16x128xf32, #tpu.memory_space<vmem>>, vector<1x128xf32>
    %c3 = arith.constant 3 : index
    %c0_20 = arith.constant 0 : index
    %25 = vector.load %arg10[%c3, %c0_20] : memref<16x128xf32, #tpu.memory_space<vmem>>, vector<1x128xf32>
    %26 = arith.truncf %1 : vector<16x32xf32> to vector<16x32xbf16>
    %27 = vector.extract_strided_slice %23 {offsets = [0, 0], sizes = [32, 96], strides = [1, 1]} : vector<32x128xbf16> to vector<32x96xbf16>
    %cst_21 = arith.constant dense<0.000000e+00> : vector<16x96xf32>
    %28 = tpu.matmul %26, %27, %cst_21 {dimension_numbers = #tpu.dot_dimension_numbers<[1], [0], [0], [1], [0, 0, 1, 1], [], []>} : vector<16x32xbf16>, vector<32x96xbf16>, vector<16x96xf32> -> vector<16x96xf32>
    %29 = vector.extract_strided_slice %24 {offsets = [0, 0], sizes = [1, 96], strides = [1, 1]} : vector<1x128xf32> to vector<1x96xf32>
    %30 = vector.broadcast %29 : vector<1x96xf32> to vector<16x96xf32>
    %31 = arith.addf %28, %30 : vector<16x96xf32>
    %32 = vector.extract_strided_slice %31 {offsets = [0, 0], sizes = [16, 32], strides = [1, 1]} : vector<16x96xf32> to vector<16x32xf32>
    %33 = vector.extract_strided_slice %31 {offsets = [0, 32], sizes = [16, 32], strides = [1, 1]} : vector<16x96xf32> to vector<16x32xf32>
    %34 = vector.extract_strided_slice %31 {offsets = [0, 64], sizes = [16, 32], strides = [1, 1]} : vector<16x96xf32> to vector<16x32xf32>
    %35 = vector.shape_cast %32 : vector<16x32xf32> to vector<2x8x32xf32>
    %36 = arith.truncf %35 : vector<2x8x32xf32> to vector<2x8x32xbf16>
    %37 = vector.shape_cast %33 : vector<16x32xf32> to vector<2x8x32xf32>
    %38 = arith.truncf %37 : vector<2x8x32xf32> to vector<2x8x32xbf16>
    %39 = vector.shape_cast %34 : vector<16x32xf32> to vector<2x8x32xf32>
    %40 = arith.truncf %39 : vector<2x8x32xf32> to vector<2x8x32xbf16>
    "tpu.trace_start"() <{level = 10 : i32, message = "bqd,bkd->bqk"}> : () -> ()
    %cst_22 = arith.constant dense<0.000000e+00> : vector<2x8x8xf32>
    %41 = tpu.matmul %36, %38, %cst_22 {dimension_numbers = #tpu.dot_dimension_numbers<[2], [2], [1], [1], [0, 0, 0, 1, 1, 1], [0], [0]>} : vector<2x8x32xbf16>, vector<2x8x32xbf16>, vector<2x8x8xf32> -> vector<2x8x8xf32>
    "tpu.trace_stop"() : () -> ()
    %cst_23 = arith.constant 0.176776692 : f32
    %42 = vector.broadcast %cst_23 : f32 to vector<2x8x8xf32>
    %43 = arith.mulf %41, %42 : vector<2x8x8xf32>
    %44 = vector.broadcast %9 : vector<2x1x8xf32> to vector<2x8x8xf32>
    %45 = arith.addf %43, %44 : vector<2x8x8xf32>
    %cst_24 = arith.constant dense<0xFF800000> : vector<2x8xf32>
    %46 = vector.multi_reduction <maximumf>, %45, %cst_24 [2] : vector<2x8x8xf32> to vector<2x8xf32>
    %47 = vector.shape_cast %46 : vector<2x8xf32> to vector<2x8x1xf32>
    %48 = vector.broadcast %47 : vector<2x8x1xf32> to vector<2x8x8xf32>
    %49 = arith.subf %45, %48 : vector<2x8x8xf32>
    %50 = math.exp %49 : vector<2x8x8xf32>
    %cst_25 = arith.constant dense<0.000000e+00> : vector<2x8xf32>
    %51 = vector.multi_reduction <add>, %50, %cst_25 [2] : vector<2x8x8xf32> to vector<2x8xf32>
    %52 = vector.shape_cast %51 : vector<2x8xf32> to vector<2x8x1xf32>
    %cst_26 = arith.constant 9.99999968E-21 : f32
    %53 = vector.broadcast %cst_26 : f32 to vector<2x8x1xf32>
    %54 = arith.maximumf %52, %53 : vector<2x8x1xf32>
    %55 = tpu.reciprocal %54 {approx = true} : vector<2x8x1xf32> -> vector<2x8x1xf32>
    %56 = vector.broadcast %55 : vector<2x8x1xf32> to vector<2x8x8xf32>
    %57 = arith.mulf %50, %56 : vector<2x8x8xf32>
    %58 = arith.truncf %57 : vector<2x8x8xf32> to vector<2x8x8xbf16>
    "tpu.trace_start"() <{level = 10 : i32, message = "bqk,bkd->bqd"}> : () -> ()
    %cst_27 = arith.constant dense<0.000000e+00> : vector<2x8x32xf32>
    %59 = tpu.matmul %58, %40, %cst_27 {dimension_numbers = #tpu.dot_dimension_numbers<[2], [1], [1], [2], [0, 0, 0, 1, 1, 2], [0], [0]>} : vector<2x8x8xbf16>, vector<2x8x32xbf16>, vector<2x8x32xf32> -> vector<2x8x32xf32>
    "tpu.trace_stop"() : () -> ()
    %60 = vector.shape_cast %59 : vector<2x8x32xf32> to vector<16x32xf32>
    %61 = arith.truncf %60 : vector<16x32xf32> to vector<16x32xbf16>
    %62 = vector.extract_strided_slice %23 {offsets = [0, 96], sizes = [32, 32], strides = [1, 1]} : vector<32x128xbf16> to vector<32x32xbf16>
    %cst_28 = arith.constant dense<0.000000e+00> : vector<16x32xf32>
    %63 = tpu.matmul %61, %62, %cst_28 {dimension_numbers = #tpu.dot_dimension_numbers<[1], [0], [0], [1], [0, 0, 1, 1], [], []>} : vector<16x32xbf16>, vector<32x32xbf16>, vector<16x32xf32> -> vector<16x32xf32>
    %64 = vector.extract_strided_slice %24 {offsets = [0, 96], sizes = [1, 32], strides = [1, 1]} : vector<1x128xf32> to vector<1x32xf32>
    %65 = vector.broadcast %64 : vector<1x32xf32> to vector<16x32xf32>
    %66 = arith.addf %63, %65 : vector<16x32xf32>
    %67 = arith.addf %1, %66 : vector<16x32xf32>
    %68 = vector.extract_strided_slice %25 {offsets = [0, 0], sizes = [1, 32], strides = [1, 1]} : vector<1x128xf32> to vector<1x32xf32>
    %69 = vector.extract_strided_slice %25 {offsets = [0, 32], sizes = [1, 32], strides = [1, 1]} : vector<1x128xf32> to vector<1x32xf32>
    %cst_29 = arith.constant dense<0.000000e+00> : vector<16xf32>
    %70 = vector.multi_reduction <add>, %67, %cst_29 [1] : vector<16x32xf32> to vector<16xf32>
    %71 = vector.shape_cast %70 : vector<16xf32> to vector<16x1xf32>
    %cst_30 = arith.constant 3.200000e+01 : f32
    %72 = vector.broadcast %cst_30 : f32 to vector<16x1xf32>
    %73 = arith.divf %71, %72 : vector<16x1xf32>
    %74 = vector.broadcast %73 : vector<16x1xf32> to vector<16x32xf32>
    %75 = arith.subf %67, %74 : vector<16x32xf32>
    %76 = arith.mulf %75, %75 : vector<16x32xf32>
    %cst_31 = arith.constant dense<0.000000e+00> : vector<16xf32>
    %77 = vector.multi_reduction <add>, %76, %cst_31 [1] : vector<16x32xf32> to vector<16xf32>
    %78 = vector.shape_cast %77 : vector<16xf32> to vector<16x1xf32>
    %cst_32 = arith.constant 3.200000e+01 : f32
    %79 = vector.broadcast %cst_32 : f32 to vector<16x1xf32>
    %80 = arith.divf %78, %79 : vector<16x1xf32>
    %81 = vector.broadcast %73 : vector<16x1xf32> to vector<16x32xf32>
    %82 = arith.subf %67, %81 : vector<16x32xf32>
    %cst_33 = arith.constant 9.99999974E-6 : f32
    %83 = vector.broadcast %cst_33 : f32 to vector<16x1xf32>
    %84 = arith.addf %80, %83 : vector<16x1xf32>
    %85 = math.rsqrt %84 : vector<16x1xf32>
    %86 = vector.broadcast %85 : vector<16x1xf32> to vector<16x32xf32>
    %87 = arith.mulf %82, %86 : vector<16x32xf32>
    %88 = vector.broadcast %68 : vector<1x32xf32> to vector<16x32xf32>
    %89 = arith.mulf %87, %88 : vector<16x32xf32>
    %90 = vector.broadcast %69 : vector<1x32xf32> to vector<16x32xf32>
    %91 = arith.addf %89, %90 : vector<16x32xf32>
    %c0_34 = arith.constant 0 : index
    %c0_35 = arith.constant 0 : index
    %c0_36 = arith.constant 0 : index
    %92 = vector.load %arg7[%c0_34, %c0_35, %c0_36] : memref<2x32x64xbf16, #tpu.memory_space<vmem>>, vector<1x32x64xbf16>
    %93 = vector.shape_cast %92 : vector<1x32x64xbf16> to vector<32x64xbf16>
    %c0_37 = arith.constant 0 : index
    %c0_38 = arith.constant 0 : index
    %c0_39 = arith.constant 0 : index
    %94 = vector.load %arg8[%c0_37, %c0_38, %c0_39] : memref<2x64x32xbf16, #tpu.memory_space<vmem>>, vector<1x64x32xbf16>
    %95 = vector.shape_cast %94 : vector<1x64x32xbf16> to vector<64x32xbf16>
    %c6 = arith.constant 6 : index
    %c0_40 = arith.constant 0 : index
    %96 = vector.load %arg10[%c6, %c0_40] : memref<16x128xf32, #tpu.memory_space<vmem>>, vector<1x128xf32>
    %97 = vector.extract_strided_slice %96 {offsets = [0, 0], sizes = [1, 64], strides = [1, 1]} : vector<1x128xf32> to vector<1x64xf32>
    %c8 = arith.constant 8 : index
    %c0_41 = arith.constant 0 : index
    %98 = vector.load %arg10[%c8, %c0_41] : memref<16x128xf32, #tpu.memory_space<vmem>>, vector<1x128xf32>
    %99 = arith.truncf %91 : vector<16x32xf32> to vector<16x32xbf16>
    %cst_42 = arith.constant dense<0.000000e+00> : vector<16x64xf32>
    %100 = tpu.matmul %99, %93, %cst_42 {dimension_numbers = #tpu.dot_dimension_numbers<[1], [0], [0], [1], [0, 0, 1, 1], [], []>} : vector<16x32xbf16>, vector<32x64xbf16>, vector<16x64xf32> -> vector<16x64xf32>
    %101 = vector.broadcast %97 : vector<1x64xf32> to vector<16x64xf32>
    %102 = arith.addf %100, %101 : vector<16x64xf32>
    %103 = arith.mulf %102, %102 : vector<16x64xf32>
    %104 = arith.mulf %102, %103 : vector<16x64xf32>
    %cst_43 = arith.constant 4.471500e-02 : f32
    %105 = vector.broadcast %cst_43 : f32 to vector<16x64xf32>
    %106 = arith.mulf %105, %104 : vector<16x64xf32>
    %107 = arith.addf %102, %106 : vector<16x64xf32>
    %cst_44 = arith.constant 0.797884583 : f32
    %108 = vector.broadcast %cst_44 : f32 to vector<16x64xf32>
    %109 = arith.mulf %108, %107 : vector<16x64xf32>
    %110 = math.tanh %109 : vector<16x64xf32>
    %cst_45 = arith.constant 1.000000e+00 : f32
    %111 = vector.broadcast %cst_45 : f32 to vector<16x64xf32>
    %112 = arith.addf %111, %110 : vector<16x64xf32>
    %cst_46 = arith.constant 5.000000e-01 : f32
    %113 = vector.broadcast %cst_46 : f32 to vector<16x64xf32>
    %114 = arith.mulf %113, %112 : vector<16x64xf32>
    %115 = arith.mulf %102, %114 : vector<16x64xf32>
    %116 = arith.truncf %115 : vector<16x64xf32> to vector<16x64xbf16>
    %cst_47 = arith.constant dense<0.000000e+00> : vector<16x32xf32>
    %117 = tpu.matmul %116, %95, %cst_47 {dimension_numbers = #tpu.dot_dimension_numbers<[1], [0], [0], [1], [0, 0, 1, 1], [], []>} : vector<16x64xbf16>, vector<64x32xbf16>, vector<16x32xf32> -> vector<16x32xf32>
    %118 = vector.extract_strided_slice %98 {offsets = [0, 0], sizes = [1, 32], strides = [1, 1]} : vector<1x128xf32> to vector<1x32xf32>
    %119 = vector.broadcast %118 : vector<1x32xf32> to vector<16x32xf32>
    %120 = arith.addf %117, %119 : vector<16x32xf32>
    %121 = arith.addf %91, %120 : vector<16x32xf32>
    %122 = vector.extract_strided_slice %98 {offsets = [0, 32], sizes = [1, 32], strides = [1, 1]} : vector<1x128xf32> to vector<1x32xf32>
    %123 = vector.extract_strided_slice %98 {offsets = [0, 64], sizes = [1, 32], strides = [1, 1]} : vector<1x128xf32> to vector<1x32xf32>
    %cst_48 = arith.constant dense<0.000000e+00> : vector<16xf32>
    %124 = vector.multi_reduction <add>, %121, %cst_48 [1] : vector<16x32xf32> to vector<16xf32>
    %125 = vector.shape_cast %124 : vector<16xf32> to vector<16x1xf32>
    %cst_49 = arith.constant 3.200000e+01 : f32
    %126 = vector.broadcast %cst_49 : f32 to vector<16x1xf32>
    %127 = arith.divf %125, %126 : vector<16x1xf32>
    %128 = vector.broadcast %127 : vector<16x1xf32> to vector<16x32xf32>
    %129 = arith.subf %121, %128 : vector<16x32xf32>
    %130 = arith.mulf %129, %129 : vector<16x32xf32>
    %cst_50 = arith.constant dense<0.000000e+00> : vector<16xf32>
    %131 = vector.multi_reduction <add>, %130, %cst_50 [1] : vector<16x32xf32> to vector<16xf32>
    %132 = vector.shape_cast %131 : vector<16xf32> to vector<16x1xf32>
    %cst_51 = arith.constant 3.200000e+01 : f32
    %133 = vector.broadcast %cst_51 : f32 to vector<16x1xf32>
    %134 = arith.divf %132, %133 : vector<16x1xf32>
    %135 = vector.broadcast %127 : vector<16x1xf32> to vector<16x32xf32>
    %136 = arith.subf %121, %135 : vector<16x32xf32>
    %cst_52 = arith.constant 9.99999974E-6 : f32
    %137 = vector.broadcast %cst_52 : f32 to vector<16x1xf32>
    %138 = arith.addf %134, %137 : vector<16x1xf32>
    %139 = math.rsqrt %138 : vector<16x1xf32>
    %140 = vector.broadcast %139 : vector<16x1xf32> to vector<16x32xf32>
    %141 = arith.mulf %136, %140 : vector<16x32xf32>
    %142 = vector.broadcast %122 : vector<1x32xf32> to vector<16x32xf32>
    %143 = arith.mulf %141, %142 : vector<16x32xf32>
    %144 = vector.broadcast %123 : vector<1x32xf32> to vector<16x32xf32>
    %145 = arith.addf %143, %144 : vector<16x32xf32>
    %146 = vector.shape_cast %145 : vector<16x32xf32> to vector<2x8x32xf32>
    %c0_53 = arith.constant 0 : index
    %c0_54 = arith.constant 0 : index
    %c0_55 = arith.constant 0 : index
    %147 = vector.load %arg11[%c0_53, %c0_54, %c0_55] : memref<2x8x32xf32, #tpu.memory_space<vmem>>, vector<2x8x32xf32>
    tpu.vector_store %arg11[%c0_53, %c0_54, %c0_55], %146 {strides = array<i32>} : memref<2x8x32xf32, #tpu.memory_space<vmem>>, vector<2x8x32xf32>,
    %c11 = arith.constant 11 : index
    %c0_56 = arith.constant 0 : index
    %148 = vector.load %arg10[%c11, %c0_56] : memref<16x128xf32, #tpu.memory_space<vmem>>, vector<1x128xf32>
    %149 = vector.extract_strided_slice %148 {offsets = [0, 0], sizes = [1, 32], strides = [1, 1]} : vector<1x128xf32> to vector<1x32xf32>
    %150 = vector.extract_strided_slice %148 {offsets = [0, 32], sizes = [1, 1], strides = [1, 1]} : vector<1x128xf32> to vector<1x1xf32>
    %151 = vector.broadcast %149 : vector<1x32xf32> to vector<16x32xf32>
    %152 = arith.mulf %145, %151 : vector<16x32xf32>
    %cst_57 = arith.constant dense<0.000000e+00> : vector<16xf32>
    %153 = vector.multi_reduction <add>, %152, %cst_57 [1] : vector<16x32xf32> to vector<16xf32>
    %154 = vector.shape_cast %153 : vector<16xf32> to vector<16x1xf32>
    %155 = vector.broadcast %150 : vector<1x1xf32> to vector<16x1xf32>
    %156 = arith.addf %154, %155 : vector<16x1xf32>
    %157 = arith.negf %156 : vector<16x1xf32>
    %158 = math.exp %157 : vector<16x1xf32>
    %cst_58 = arith.constant 1.000000e+00 : f32
    %159 = vector.broadcast %cst_58 : f32 to vector<16x1xf32>
    %160 = arith.addf %159, %158 : vector<16x1xf32>
    %161 = arith.divf %159, %160 : vector<16x1xf32>
    %c1 = arith.constant 1 : index
    %c0_59 = arith.constant 0 : index
    %c0_60 = arith.constant 0 : index
    %162 = vector.load %arg6[%c1, %c0_59, %c0_60] : memref<3x32x128xbf16, #tpu.memory_space<vmem>>, vector<1x32x128xbf16>
    %163 = vector.shape_cast %162 : vector<1x32x128xbf16> to vector<32x128xbf16>
    %c1_61 = arith.constant 1 : index
    %c0_62 = arith.constant 0 : index
    %164 = vector.load %arg10[%c1_61, %c0_62] : memref<16x128xf32, #tpu.memory_space<vmem>>, vector<1x128xf32>
    %c4 = arith.constant 4 : index
    %c0_63 = arith.constant 0 : index
    %165 = vector.load %arg10[%c4, %c0_63] : memref<16x128xf32, #tpu.memory_space<vmem>>, vector<1x128xf32>
    %166 = arith.truncf %3 : vector<16x32xf32> to vector<16x32xbf16>
    %167 = vector.extract_strided_slice %163 {offsets = [0, 0], sizes = [32, 96], strides = [1, 1]} : vector<32x128xbf16> to vector<32x96xbf16>
    %cst_64 = arith.constant dense<0.000000e+00> : vector<16x96xf32>
    %168 = tpu.matmul %166, %167, %cst_64 {dimension_numbers = #tpu.dot_dimension_numbers<[1], [0], [0], [1], [0, 0, 1, 1], [], []>} : vector<16x32xbf16>, vector<32x96xbf16>, vector<16x96xf32> -> vector<16x96xf32>
    %169 = vector.extract_strided_slice %164 {offsets = [0, 0], sizes = [1, 96], strides = [1, 1]} : vector<1x128xf32> to vector<1x96xf32>
    %170 = vector.broadcast %169 : vector<1x96xf32> to vector<16x96xf32>
    %171 = arith.addf %168, %170 : vector<16x96xf32>
    %172 = vector.extract_strided_slice %171 {offsets = [0, 0], sizes = [16, 32], strides = [1, 1]} : vector<16x96xf32> to vector<16x32xf32>
    %173 = vector.extract_strided_slice %171 {offsets = [0, 32], sizes = [16, 32], strides = [1, 1]} : vector<16x96xf32> to vector<16x32xf32>
    %174 = vector.extract_strided_slice %171 {offsets = [0, 64], sizes = [16, 32], strides = [1, 1]} : vector<16x96xf32> to vector<16x32xf32>
    %175 = vector.shape_cast %172 : vector<16x32xf32> to vector<2x8x32xf32>
    %176 = arith.truncf %175 : vector<2x8x32xf32> to vector<2x8x32xbf16>
    %177 = vector.shape_cast %173 : vector<16x32xf32> to vector<2x8x32xf32>
    %178 = arith.truncf %177 : vector<2x8x32xf32> to vector<2x8x32xbf16>
    %179 = vector.shape_cast %174 : vector<16x32xf32> to vector<2x8x32xf32>
    %180 = arith.truncf %179 : vector<2x8x32xf32> to vector<2x8x32xbf16>
    "tpu.trace_start"() <{level = 10 : i32, message = "bqd,bkd->bqk"}> : () -> ()
    %cst_65 = arith.constant dense<0.000000e+00> : vector<2x8x8xf32>
    %181 = tpu.matmul %176, %178, %cst_65 {dimension_numbers = #tpu.dot_dimension_numbers<[2], [2], [1], [1], [0, 0, 0, 1, 1, 1], [0], [0]>} : vector<2x8x32xbf16>, vector<2x8x32xbf16>, vector<2x8x8xf32> -> vector<2x8x8xf32>
    "tpu.trace_stop"() : () -> ()
    %cst_66 = arith.constant 0.176776692 : f32
    %182 = vector.broadcast %cst_66 : f32 to vector<2x8x8xf32>
    %183 = arith.mulf %181, %182 : vector<2x8x8xf32>
    %184 = arith.addf %183, %21 : vector<2x8x8xf32>
    %cst_67 = arith.constant dense<0xFF800000> : vector<2x8xf32>
    %185 = vector.multi_reduction <maximumf>, %184, %cst_67 [2] : vector<2x8x8xf32> to vector<2x8xf32>
    %186 = vector.shape_cast %185 : vector<2x8xf32> to vector<2x8x1xf32>
    %187 = vector.broadcast %186 : vector<2x8x1xf32> to vector<2x8x8xf32>
    %188 = arith.subf %184, %187 : vector<2x8x8xf32>
    %189 = math.exp %188 : vector<2x8x8xf32>
    %cst_68 = arith.constant dense<0.000000e+00> : vector<2x8xf32>
    %190 = vector.multi_reduction <add>, %189, %cst_68 [2] : vector<2x8x8xf32> to vector<2x8xf32>
    %191 = vector.shape_cast %190 : vector<2x8xf32> to vector<2x8x1xf32>
    %cst_69 = arith.constant 9.99999968E-21 : f32
    %192 = vector.broadcast %cst_69 : f32 to vector<2x8x1xf32>
    %193 = arith.maximumf %191, %192 : vector<2x8x1xf32>
    %194 = tpu.reciprocal %193 {approx = true} : vector<2x8x1xf32> -> vector<2x8x1xf32>
    %195 = vector.broadcast %194 : vector<2x8x1xf32> to vector<2x8x8xf32>
    %196 = arith.mulf %189, %195 : vector<2x8x8xf32>
    %197 = arith.truncf %196 : vector<2x8x8xf32> to vector<2x8x8xbf16>
    "tpu.trace_start"() <{level = 10 : i32, message = "bqk,bkd->bqd"}> : () -> ()
    %cst_70 = arith.constant dense<0.000000e+00> : vector<2x8x32xf32>
    %198 = tpu.matmul %197, %180, %cst_70 {dimension_numbers = #tpu.dot_dimension_numbers<[2], [1], [1], [2], [0, 0, 0, 1, 1, 2], [0], [0]>} : vector<2x8x8xbf16>, vector<2x8x32xbf16>, vector<2x8x32xf32> -> vector<2x8x32xf32>
    "tpu.trace_stop"() : () -> ()
    %199 = vector.shape_cast %198 : vector<2x8x32xf32> to vector<16x32xf32>
    %200 = arith.truncf %199 : vector<16x32xf32> to vector<16x32xbf16>
    %201 = vector.extract_strided_slice %163 {offsets = [0, 96], sizes = [32, 32], strides = [1, 1]} : vector<32x128xbf16> to vector<32x32xbf16>
    %cst_71 = arith.constant dense<0.000000e+00> : vector<16x32xf32>
    %202 = tpu.matmul %200, %201, %cst_71 {dimension_numbers = #tpu.dot_dimension_numbers<[1], [0], [0], [1], [0, 0, 1, 1], [], []>} : vector<16x32xbf16>, vector<32x32xbf16>, vector<16x32xf32> -> vector<16x32xf32>
    %203 = vector.extract_strided_slice %164 {offsets = [0, 96], sizes = [1, 32], strides = [1, 1]} : vector<1x128xf32> to vector<1x32xf32>
    %204 = vector.broadcast %203 : vector<1x32xf32> to vector<16x32xf32>
    %205 = arith.addf %202, %204 : vector<16x32xf32>
    %206 = arith.addf %3, %205 : vector<16x32xf32>
    %207 = vector.extract_strided_slice %165 {offsets = [0, 0], sizes = [1, 32], strides = [1, 1]} : vector<1x128xf32> to vector<1x32xf32>
    %208 = vector.extract_strided_slice %165 {offsets = [0, 32], sizes = [1, 32], strides = [1, 1]} : vector<1x128xf32> to vector<1x32xf32>
    %cst_72 = arith.constant dense<0.000000e+00> : vector<16xf32>
    %209 = vector.multi_reduction <add>, %206, %cst_72 [1] : vector<16x32xf32> to vector<16xf32>
    %210 = vector.shape_cast %209 : vector<16xf32> to vector<16x1xf32>
    %cst_73 = arith.constant 3.200000e+01 : f32
    %211 = vector.broadcast %cst_73 : f32 to vector<16x1xf32>
    %212 = arith.divf %210, %211 : vector<16x1xf32>
    %213 = vector.broadcast %212 : vector<16x1xf32> to vector<16x32xf32>
    %214 = arith.subf %206, %213 : vector<16x32xf32>
    %215 = arith.mulf %214, %214 : vector<16x32xf32>
    %cst_74 = arith.constant dense<0.000000e+00> : vector<16xf32>
    %216 = vector.multi_reduction <add>, %215, %cst_74 [1] : vector<16x32xf32> to vector<16xf32>
    %217 = vector.shape_cast %216 : vector<16xf32> to vector<16x1xf32>
    %cst_75 = arith.constant 3.200000e+01 : f32
    %218 = vector.broadcast %cst_75 : f32 to vector<16x1xf32>
    %219 = arith.divf %217, %218 : vector<16x1xf32>
    %220 = vector.broadcast %212 : vector<16x1xf32> to vector<16x32xf32>
    %221 = arith.subf %206, %220 : vector<16x32xf32>
    %cst_76 = arith.constant 9.99999974E-6 : f32
    %222 = vector.broadcast %cst_76 : f32 to vector<16x1xf32>
    %223 = arith.addf %219, %222 : vector<16x1xf32>
    %224 = math.rsqrt %223 : vector<16x1xf32>
    %225 = vector.broadcast %224 : vector<16x1xf32> to vector<16x32xf32>
    %226 = arith.mulf %221, %225 : vector<16x32xf32>
    %227 = vector.broadcast %207 : vector<1x32xf32> to vector<16x32xf32>
    %228 = arith.mulf %226, %227 : vector<16x32xf32>
    %229 = vector.broadcast %208 : vector<1x32xf32> to vector<16x32xf32>
    %230 = arith.addf %228, %229 : vector<16x32xf32>
    %c2 = arith.constant 2 : index
    %c0_77 = arith.constant 0 : index
    %c0_78 = arith.constant 0 : index
    %231 = vector.load %arg6[%c2, %c0_77, %c0_78] : memref<3x32x128xbf16, #tpu.memory_space<vmem>>, vector<1x32x128xbf16>
    %232 = vector.shape_cast %231 : vector<1x32x128xbf16> to vector<32x128xbf16>
    %c2_79 = arith.constant 2 : index
    %c0_80 = arith.constant 0 : index
    %233 = vector.load %arg10[%c2_79, %c0_80] : memref<16x128xf32, #tpu.memory_space<vmem>>, vector<1x128xf32>
    %c5 = arith.constant 5 : index
    %c0_81 = arith.constant 0 : index
    %234 = vector.load %arg10[%c5, %c0_81] : memref<16x128xf32, #tpu.memory_space<vmem>>, vector<1x128xf32>
    %235 = arith.truncf %230 : vector<16x32xf32> to vector<16x32xbf16>
    %236 = arith.truncf %145 : vector<16x32xf32> to vector<16x32xbf16>
    %237 = vector.extract_strided_slice %232 {offsets = [0, 0], sizes = [32, 32], strides = [1, 1]} : vector<32x128xbf16> to vector<32x32xbf16>
    %cst_82 = arith.constant dense<0.000000e+00> : vector<16x32xf32>
    %238 = tpu.matmul %235, %237, %cst_82 {dimension_numbers = #tpu.dot_dimension_numbers<[1], [0], [0], [1], [0, 0, 1, 1], [], []>} : vector<16x32xbf16>, vector<32x32xbf16>, vector<16x32xf32> -> vector<16x32xf32>
    %239 = vector.extract_strided_slice %233 {offsets = [0, 0], sizes = [1, 32], strides = [1, 1]} : vector<1x128xf32> to vector<1x32xf32>
    %240 = vector.broadcast %239 : vector<1x32xf32> to vector<16x32xf32>
    %241 = arith.addf %238, %240 : vector<16x32xf32>
    %242 = vector.extract_strided_slice %232 {offsets = [0, 32], sizes = [32, 64], strides = [1, 1]} : vector<32x128xbf16> to vector<32x64xbf16>
    %cst_83 = arith.constant dense<0.000000e+00> : vector<16x64xf32>
    %243 = tpu.matmul %236, %242, %cst_83 {dimension_numbers = #tpu.dot_dimension_numbers<[1], [0], [0], [1], [0, 0, 1, 1], [], []>} : vector<16x32xbf16>, vector<32x64xbf16>, vector<16x64xf32> -> vector<16x64xf32>
    %244 = vector.extract_strided_slice %233 {offsets = [0, 32], sizes = [1, 64], strides = [1, 1]} : vector<1x128xf32> to vector<1x64xf32>
    %245 = vector.broadcast %244 : vector<1x64xf32> to vector<16x64xf32>
    %246 = arith.addf %243, %245 : vector<16x64xf32>
    %247 = vector.extract_strided_slice %246 {offsets = [0, 0], sizes = [16, 32], strides = [1, 1]} : vector<16x64xf32> to vector<16x32xf32>
    %248 = vector.extract_strided_slice %246 {offsets = [0, 32], sizes = [16, 32], strides = [1, 1]} : vector<16x64xf32> to vector<16x32xf32>
    %249 = vector.shape_cast %241 : vector<16x32xf32> to vector<2x8x32xf32>
    %250 = arith.truncf %249 : vector<2x8x32xf32> to vector<2x8x32xbf16>
    %251 = vector.shape_cast %247 : vector<16x32xf32> to vector<2x8x32xf32>
    %252 = arith.truncf %251 : vector<2x8x32xf32> to vector<2x8x32xbf16>
    %253 = vector.shape_cast %248 : vector<16x32xf32> to vector<2x8x32xf32>
    %254 = arith.truncf %253 : vector<2x8x32xf32> to vector<2x8x32xbf16>
    "tpu.trace_start"() <{level = 10 : i32, message = "bqd,bkd->bqk"}> : () -> ()
    %cst_84 = arith.constant dense<0.000000e+00> : vector<2x8x8xf32>
    %255 = tpu.matmul %250, %252, %cst_84 {dimension_numbers = #tpu.dot_dimension_numbers<[2], [2], [1], [1], [0, 0, 0, 1, 1, 1], [0], [0]>} : vector<2x8x32xbf16>, vector<2x8x32xbf16>, vector<2x8x8xf32> -> vector<2x8x8xf32>
    "tpu.trace_stop"() : () -> ()
    %cst_85 = arith.constant 0.176776692 : f32
    %256 = vector.broadcast %cst_85 : f32 to vector<2x8x8xf32>
    %257 = arith.mulf %255, %256 : vector<2x8x8xf32>
    %258 = vector.broadcast %9 : vector<2x1x8xf32> to vector<2x8x8xf32>
    %259 = arith.addf %257, %258 : vector<2x8x8xf32>
    %cst_86 = arith.constant dense<0xFF800000> : vector<2x8xf32>
    %260 = vector.multi_reduction <maximumf>, %259, %cst_86 [2] : vector<2x8x8xf32> to vector<2x8xf32>
    %261 = vector.shape_cast %260 : vector<2x8xf32> to vector<2x8x1xf32>
    %262 = vector.broadcast %261 : vector<2x8x1xf32> to vector<2x8x8xf32>
    %263 = arith.subf %259, %262 : vector<2x8x8xf32>
    %264 = math.exp %263 : vector<2x8x8xf32>
    %cst_87 = arith.constant dense<0.000000e+00> : vector<2x8xf32>
    %265 = vector.multi_reduction <add>, %264, %cst_87 [2] : vector<2x8x8xf32> to vector<2x8xf32>
    %266 = vector.shape_cast %265 : vector<2x8xf32> to vector<2x8x1xf32>
    %cst_88 = arith.constant 9.99999968E-21 : f32
    %267 = vector.broadcast %cst_88 : f32 to vector<2x8x1xf32>
    %268 = arith.maximumf %266, %267 : vector<2x8x1xf32>
    %269 = tpu.reciprocal %268 {approx = true} : vector<2x8x1xf32> -> vector<2x8x1xf32>
    %270 = vector.broadcast %269 : vector<2x8x1xf32> to vector<2x8x8xf32>
    %271 = arith.mulf %264, %270 : vector<2x8x8xf32>
    %272 = arith.truncf %271 : vector<2x8x8xf32> to vector<2x8x8xbf16>
    "tpu.trace_start"() <{level = 10 : i32, message = "bqk,bkd->bqd"}> : () -> ()
    %cst_89 = arith.constant dense<0.000000e+00> : vector<2x8x32xf32>
    %273 = tpu.matmul %272, %254, %cst_89 {dimension_numbers = #tpu.dot_dimension_numbers<[2], [1], [1], [2], [0, 0, 0, 1, 1, 2], [0], [0]>} : vector<2x8x8xbf16>, vector<2x8x32xbf16>, vector<2x8x32xf32> -> vector<2x8x32xf32>
    "tpu.trace_stop"() : () -> ()
    %274 = vector.shape_cast %273 : vector<2x8x32xf32> to vector<16x32xf32>
    %275 = arith.truncf %274 : vector<16x32xf32> to vector<16x32xbf16>
    %276 = vector.extract_strided_slice %232 {offsets = [0, 96], sizes = [32, 32], strides = [1, 1]} : vector<32x128xbf16> to vector<32x32xbf16>
    %cst_90 = arith.constant dense<0.000000e+00> : vector<16x32xf32>
    %277 = tpu.matmul %275, %276, %cst_90 {dimension_numbers = #tpu.dot_dimension_numbers<[1], [0], [0], [1], [0, 0, 1, 1], [], []>} : vector<16x32xbf16>, vector<32x32xbf16>, vector<16x32xf32> -> vector<16x32xf32>
    %278 = vector.extract_strided_slice %233 {offsets = [0, 96], sizes = [1, 32], strides = [1, 1]} : vector<1x128xf32> to vector<1x32xf32>
    %279 = vector.broadcast %278 : vector<1x32xf32> to vector<16x32xf32>
    %280 = arith.addf %277, %279 : vector<16x32xf32>
    %281 = arith.addf %230, %280 : vector<16x32xf32>
    %282 = vector.extract_strided_slice %234 {offsets = [0, 0], sizes = [1, 32], strides = [1, 1]} : vector<1x128xf32> to vector<1x32xf32>
    %283 = vector.extract_strided_slice %234 {offsets = [0, 32], sizes = [1, 32], strides = [1, 1]} : vector<1x128xf32> to vector<1x32xf32>
    %cst_91 = arith.constant dense<0.000000e+00> : vector<16xf32>
    %284 = vector.multi_reduction <add>, %281, %cst_91 [1] : vector<16x32xf32> to vector<16xf32>
    %285 = vector.shape_cast %284 : vector<16xf32> to vector<16x1xf32>
    %cst_92 = arith.constant 3.200000e+01 : f32
    %286 = vector.broadcast %cst_92 : f32 to vector<16x1xf32>
    %287 = arith.divf %285, %286 : vector<16x1xf32>
    %288 = vector.broadcast %287 : vector<16x1xf32> to vector<16x32xf32>
    %289 = arith.subf %281, %288 : vector<16x32xf32>
    %290 = arith.mulf %289, %289 : vector<16x32xf32>
    %cst_93 = arith.constant dense<0.000000e+00> : vector<16xf32>
    %291 = vector.multi_reduction <add>, %290, %cst_93 [1] : vector<16x32xf32> to vector<16xf32>
    %292 = vector.shape_cast %291 : vector<16xf32> to vector<16x1xf32>
    %cst_94 = arith.constant 3.200000e+01 : f32
    %293 = vector.broadcast %cst_94 : f32 to vector<16x1xf32>
    %294 = arith.divf %292, %293 : vector<16x1xf32>
    %295 = vector.broadcast %287 : vector<16x1xf32> to vector<16x32xf32>
    %296 = arith.subf %281, %295 : vector<16x32xf32>
    %cst_95 = arith.constant 9.99999974E-6 : f32
    %297 = vector.broadcast %cst_95 : f32 to vector<16x1xf32>
    %298 = arith.addf %294, %297 : vector<16x1xf32>
    %299 = math.rsqrt %298 : vector<16x1xf32>
    %300 = vector.broadcast %299 : vector<16x1xf32> to vector<16x32xf32>
    %301 = arith.mulf %296, %300 : vector<16x32xf32>
    %302 = vector.broadcast %282 : vector<1x32xf32> to vector<16x32xf32>
    %303 = arith.mulf %301, %302 : vector<16x32xf32>
    %304 = vector.broadcast %283 : vector<1x32xf32> to vector<16x32xf32>
    %305 = arith.addf %303, %304 : vector<16x32xf32>
    %c1_96 = arith.constant 1 : index
    %c0_97 = arith.constant 0 : index
    %c0_98 = arith.constant 0 : index
    %306 = vector.load %arg7[%c1_96, %c0_97, %c0_98] : memref<2x32x64xbf16, #tpu.memory_space<vmem>>, vector<1x32x64xbf16>
    %307 = vector.shape_cast %306 : vector<1x32x64xbf16> to vector<32x64xbf16>
    %c1_99 = arith.constant 1 : index
    %c0_100 = arith.constant 0 : index
    %c0_101 = arith.constant 0 : index
    %308 = vector.load %arg8[%c1_99, %c0_100, %c0_101] : memref<2x64x32xbf16, #tpu.memory_space<vmem>>, vector<1x64x32xbf16>
    %309 = vector.shape_cast %308 : vector<1x64x32xbf16> to vector<64x32xbf16>
    %c7 = arith.constant 7 : index
    %c0_102 = arith.constant 0 : index
    %310 = vector.load %arg10[%c7, %c0_102] : memref<16x128xf32, #tpu.memory_space<vmem>>, vector<1x128xf32>
    %311 = vector.extract_strided_slice %310 {offsets = [0, 0], sizes = [1, 64], strides = [1, 1]} : vector<1x128xf32> to vector<1x64xf32>
    %c9 = arith.constant 9 : index
    %c0_103 = arith.constant 0 : index
    %312 = vector.load %arg10[%c9, %c0_103] : memref<16x128xf32, #tpu.memory_space<vmem>>, vector<1x128xf32>
    %313 = arith.truncf %305 : vector<16x32xf32> to vector<16x32xbf16>
    %cst_104 = arith.constant dense<0.000000e+00> : vector<16x64xf32>
    %314 = tpu.matmul %313, %307, %cst_104 {dimension_numbers = #tpu.dot_dimension_numbers<[1], [0], [0], [1], [0, 0, 1, 1], [], []>} : vector<16x32xbf16>, vector<32x64xbf16>, vector<16x64xf32> -> vector<16x64xf32>
    %315 = vector.broadcast %311 : vector<1x64xf32> to vector<16x64xf32>
    %316 = arith.addf %314, %315 : vector<16x64xf32>
    %317 = arith.mulf %316, %316 : vector<16x64xf32>
    %318 = arith.mulf %316, %317 : vector<16x64xf32>
    %cst_105 = arith.constant 4.471500e-02 : f32
    %319 = vector.broadcast %cst_105 : f32 to vector<16x64xf32>
    %320 = arith.mulf %319, %318 : vector<16x64xf32>
    %321 = arith.addf %316, %320 : vector<16x64xf32>
    %cst_106 = arith.constant 0.797884583 : f32
    %322 = vector.broadcast %cst_106 : f32 to vector<16x64xf32>
    %323 = arith.mulf %322, %321 : vector<16x64xf32>
    %324 = math.tanh %323 : vector<16x64xf32>
    %cst_107 = arith.constant 1.000000e+00 : f32
    %325 = vector.broadcast %cst_107 : f32 to vector<16x64xf32>
    %326 = arith.addf %325, %324 : vector<16x64xf32>
    %cst_108 = arith.constant 5.000000e-01 : f32
    %327 = vector.broadcast %cst_108 : f32 to vector<16x64xf32>
    %328 = arith.mulf %327, %326 : vector<16x64xf32>
    %329 = arith.mulf %316, %328 : vector<16x64xf32>
    %330 = arith.truncf %329 : vector<16x64xf32> to vector<16x64xbf16>
    %cst_109 = arith.constant dense<0.000000e+00> : vector<16x32xf32>
    %331 = tpu.matmul %330, %309, %cst_109 {dimension_numbers = #tpu.dot_dimension_numbers<[1], [0], [0], [1], [0, 0, 1, 1], [], []>} : vector<16x64xbf16>, vector<64x32xbf16>, vector<16x32xf32> -> vector<16x32xf32>
    %332 = vector.extract_strided_slice %312 {offsets = [0, 0], sizes = [1, 32], strides = [1, 1]} : vector<1x128xf32> to vector<1x32xf32>
    %333 = vector.broadcast %332 : vector<1x32xf32> to vector<16x32xf32>
    %334 = arith.addf %331, %333 : vector<16x32xf32>
    %335 = arith.addf %305, %334 : vector<16x32xf32>
    %336 = vector.extract_strided_slice %312 {offsets = [0, 32], sizes = [1, 32], strides = [1, 1]} : vector<1x128xf32> to vector<1x32xf32>
    %337 = vector.extract_strided_slice %312 {offsets = [0, 64], sizes = [1, 32], strides = [1, 1]} : vector<1x128xf32> to vector<1x32xf32>
    %cst_110 = arith.constant dense<0.000000e+00> : vector<16xf32>
    %338 = vector.multi_reduction <add>, %335, %cst_110 [1] : vector<16x32xf32> to vector<16xf32>
    %339 = vector.shape_cast %338 : vector<16xf32> to vector<16x1xf32>
    %cst_111 = arith.constant 3.200000e+01 : f32
    %340 = vector.broadcast %cst_111 : f32 to vector<16x1xf32>
    %341 = arith.divf %339, %340 : vector<16x1xf32>
    %342 = vector.broadcast %341 : vector<16x1xf32> to vector<16x32xf32>
    %343 = arith.subf %335, %342 : vector<16x32xf32>
    %344 = arith.mulf %343, %343 : vector<16x32xf32>
    %cst_112 = arith.constant dense<0.000000e+00> : vector<16xf32>
    %345 = vector.multi_reduction <add>, %344, %cst_112 [1] : vector<16x32xf32> to vector<16xf32>
    %346 = vector.shape_cast %345 : vector<16xf32> to vector<16x1xf32>
    %cst_113 = arith.constant 3.200000e+01 : f32
    %347 = vector.broadcast %cst_113 : f32 to vector<16x1xf32>
    %348 = arith.divf %346, %347 : vector<16x1xf32>
    %349 = vector.broadcast %341 : vector<16x1xf32> to vector<16x32xf32>
    %350 = arith.subf %335, %349 : vector<16x32xf32>
    %cst_114 = arith.constant 9.99999974E-6 : f32
    %351 = vector.broadcast %cst_114 : f32 to vector<16x1xf32>
    %352 = arith.addf %348, %351 : vector<16x1xf32>
    %353 = math.rsqrt %352 : vector<16x1xf32>
    %354 = vector.broadcast %353 : vector<16x1xf32> to vector<16x32xf32>
    %355 = arith.mulf %350, %354 : vector<16x32xf32>
    %356 = vector.broadcast %336 : vector<1x32xf32> to vector<16x32xf32>
    %357 = arith.mulf %355, %356 : vector<16x32xf32>
    %358 = vector.broadcast %337 : vector<1x32xf32> to vector<16x32xf32>
    %359 = arith.addf %357, %358 : vector<16x32xf32>
    %360 = arith.truncf %359 : vector<16x32xf32> to vector<16x32xbf16>
    %c0_115 = arith.constant 0 : index
    %c0_116 = arith.constant 0 : index
    %361 = vector.load %arg9[%c0_115, %c0_116] : memref<64x32xbf16, #tpu.memory_space<vmem>>, vector<64x32xbf16>
    %cst_117 = arith.constant dense<0.000000e+00> : vector<16x64xf32>
    %362 = tpu.matmul %360, %361, %cst_117 {dimension_numbers = #tpu.dot_dimension_numbers<[1], [1], [0], [0], [0, 0, 1, 0], [], []>} : vector<16x32xbf16>, vector<64x32xbf16>, vector<16x64xf32> -> vector<16x64xf32>
    %c10 = arith.constant 10 : index
    %c0_118 = arith.constant 0 : index
    %363 = vector.load %arg10[%c10, %c0_118] : memref<16x128xf32, #tpu.memory_space<vmem>>, vector<1x128xf32>
    %364 = vector.extract_strided_slice %363 {offsets = [0, 0], sizes = [1, 64], strides = [1, 1]} : vector<1x128xf32> to vector<1x64xf32>
    %365 = vector.broadcast %364 : vector<1x64xf32> to vector<16x64xf32>
    %366 = arith.addf %362, %365 : vector<16x64xf32>
    %367 = vector.shape_cast %366 : vector<16x64xf32> to vector<2x8x64xf32>
    %c0_119 = arith.constant 0 : index
    %c0_120 = arith.constant 0 : index
    %c0_121 = arith.constant 0 : index
    %368 = vector.load %arg12[%c0_119, %c0_120, %c0_121] : memref<2x8x64xf32, #tpu.memory_space<vmem>>, vector<2x8x64xf32>
    tpu.vector_store %arg12[%c0_119, %c0_120, %c0_121], %367 {strides = array<i32>} : memref<2x8x64xf32, #tpu.memory_space<vmem>>, vector<2x8x64xf32>,
    %c0_122 = arith.constant 0 : index
    %c0_123 = arith.constant 0 : index
    %c0_124 = arith.constant 0 : index
    %369 = vector.load %arg5[%c0_122, %c0_123, %c0_124] : memref<2x8x1xi32, #tpu.memory_space<vmem>>, vector<2x8x1xi32>
    %370 = vector.shape_cast %369 : vector<2x8x1xi32> to vector<16x1xi32>
    %c-100_i32 = arith.constant -100 : i32
    %371 = vector.broadcast %c-100_i32 : i32 to vector<16x1xi32>
    %372 = arith.cmpi ne, %370, %371 : vector<16x1xi32>
    %373 = arith.extui %372 : vector<16x1xi1> to vector<16x1xi32>
    %374 = arith.sitofp %373 : vector<16x1xi32> to vector<16x1xf32>
    %cst_125 = arith.constant dense<0xFF800000> : vector<16xf32>
    %375 = vector.multi_reduction <maximumf>, %366, %cst_125 [1] : vector<16x64xf32> to vector<16xf32>
    %376 = vector.shape_cast %375 : vector<16xf32> to vector<16x1xf32>
    %377 = vector.broadcast %376 : vector<16x1xf32> to vector<16x64xf32>
    %378 = arith.subf %366, %377 : vector<16x64xf32>
    %379 = math.exp %378 : vector<16x64xf32>
    %cst_126 = arith.constant dense<0.000000e+00> : vector<16xf32>
    %380 = vector.multi_reduction <add>, %379, %cst_126 [1] : vector<16x64xf32> to vector<16xf32>
    %381 = vector.shape_cast %380 : vector<16xf32> to vector<16x1xf32>
    %382 = math.log %381 : vector<16x1xf32>
    %383 = arith.addf %382, %376 : vector<16x1xf32>
    %384 = tpu.iota {dimensions = array<i32: 1>} : vector<16x64xi32>
    %385 = vector.broadcast %370 : vector<16x1xi32> to vector<16x64xi32>
    %386 = arith.cmpi eq, %384, %385 : vector<16x64xi32>
    %cst_127 = arith.constant 0.000000e+00 : f32
    %387 = vector.broadcast %cst_127 : f32 to vector<16x64xf32>
    %388 = arith.select %386, %366, %387 : vector<16x64xi1>, vector<16x64xf32>
    %cst_128 = arith.constant dense<0.000000e+00> : vector<16xf32>
    %389 = vector.multi_reduction <add>, %388, %cst_128 [1] : vector<16x64xf32> to vector<16xf32>
    %390 = vector.shape_cast %389 : vector<16xf32> to vector<16x1xf32>
    %391 = arith.subf %383, %390 : vector<16x1xf32>
    %392 = arith.mulf %391, %374 : vector<16x1xf32>
    %393 = tpu.iota {dimensions = array<i32: 1>} : vector<16x128xi32>
    %c0_i32 = arith.constant 0 : i32
    %394 = vector.broadcast %c0_i32 : i32 to vector<16x128xi32>
    %395 = arith.cmpi eq, %393, %394 : vector<16x128xi32>
    %c1_i32 = arith.constant 1 : i32
    %396 = vector.broadcast %c1_i32 : i32 to vector<16x128xi32>
    %397 = arith.cmpi eq, %393, %396 : vector<16x128xi32>
    %c2_i32 = arith.constant 2 : i32
    %398 = vector.broadcast %c2_i32 : i32 to vector<16x128xi32>
    %399 = arith.cmpi eq, %393, %398 : vector<16x128xi32>
    %cst_129 = arith.constant 0.000000e+00 : f32
    %400 = vector.shape_cast %374 : vector<16x1xf32> to vector<16x1xf32>
    %401 = vector.broadcast %400 : vector<16x1xf32> to vector<16x128xf32>
    %402 = vector.broadcast %cst_129 : f32 to vector<16x128xf32>
    %403 = arith.select %399, %401, %402 : vector<16x128xi1>, vector<16x128xf32>
    %404 = vector.shape_cast %392 : vector<16x1xf32> to vector<16x1xf32>
    %405 = vector.broadcast %404 : vector<16x1xf32> to vector<16x128xf32>
    %406 = arith.select %397, %405, %403 : vector<16x128xi1>, vector<16x128xf32>
    %407 = vector.shape_cast %161 : vector<16x1xf32> to vector<16x1xf32>
    %408 = vector.broadcast %407 : vector<16x1xf32> to vector<16x128xf32>
    %409 = arith.select %395, %408, %406 : vector<16x128xi1>, vector<16x128xf32>
    %c0_130 = arith.constant 0 : index
    %c0_131 = arith.constant 0 : index
    %410 = vector.load %arg13[%c0_130, %c0_131] : memref<16x128xf32, #tpu.memory_space<vmem>>, vector<16x128xf32>
    tpu.vector_store %arg13[%c0_130, %c0_131], %409 {strides = array<i32>} : memref<16x128xf32, #tpu.memory_space<vmem>>, vector<16x128xf32>,
    return
  }
  func.func @transform_0(%arg0: i32) -> (i32, i32, i32) {
    %c0_i32 = arith.constant 0 : i32
    %c0_i32_0 = arith.constant 0 : i32
    %c0_i32_1 = arith.constant 0 : i32
    return %arg0, %c0_i32, %c0_i32_0 : i32, i32, i32
  }
  func.func @transform_1(%arg0: i32) -> (i32, i32, i32) {
    %c0_i32 = arith.constant 0 : i32
    %c0_i32_0 = arith.constant 0 : i32
    %c0_i32_1 = arith.constant 0 : i32
    return %arg0, %c0_i32, %c0_i32_0 : i32, i32, i32
  }
  func.func @transform_2(%arg0: i32) -> (i32, i32, i32) {
    %c0_i32 = arith.constant 0 : i32
    %c0_i32_0 = arith.constant 0 : i32
    %c0_i32_1 = arith.constant 0 : i32
    return %arg0, %c0_i32, %c0_i32_0 : i32, i32, i32
  }
  func.func @transform_3(%arg0: i32) -> (i32, i32, i32) {
    %c0_i32 = arith.constant 0 : i32
    %c0_i32_0 = arith.constant 0 : i32
    %c0_i32_1 = arith.constant 0 : i32
    return %arg0, %c0_i32, %c0_i32_0 : i32, i32, i32
  }
  func.func @transform_4(%arg0: i32) -> (i32, i32, i32) {
    %c0_i32 = arith.constant 0 : i32
    %c0_i32_0 = arith.constant 0 : i32
    %c0_i32_1 = arith.constant 0 : i32
    return %arg0, %c0_i32, %c0_i32_0 : i32, i32, i32
  }
  func.func @transform_5(%arg0: i32) -> (i32, i32, i32) {
    %c0_i32 = arith.constant 0 : i32
    %c0_i32_0 = arith.constant 0 : i32
    %c0_i32_1 = arith.constant 0 : i32
    %c0_i32_2 = arith.constant 0 : i32
    return %c0_i32, %c0_i32_0, %c0_i32_1 : i32, i32, i32
  }
  func.func @transform_6(%arg0: i32) -> (i32, i32, i32) {
    %c0_i32 = arith.constant 0 : i32
    %c0_i32_0 = arith.constant 0 : i32
    %c0_i32_1 = arith.constant 0 : i32
    %c0_i32_2 = arith.constant 0 : i32
    return %c0_i32, %c0_i32_0, %c0_i32_1 : i32, i32, i32
  }
  func.func @transform_7(%arg0: i32) -> (i32, i32, i32) {
    %c0_i32 = arith.constant 0 : i32
    %c0_i32_0 = arith.constant 0 : i32
    %c0_i32_1 = arith.constant 0 : i32
    %c0_i32_2 = arith.constant 0 : i32
    return %c0_i32, %c0_i32_0, %c0_i32_1 : i32, i32, i32
  }
  func.func @transform_8(%arg0: i32) -> (i32, i32) {
    %c0_i32 = arith.constant 0 : i32
    %c0_i32_0 = arith.constant 0 : i32
    %c0_i32_1 = arith.constant 0 : i32
    return %c0_i32, %c0_i32_0 : i32, i32
  }
  func.func @transform_9(%arg0: i32) -> (i32, i32) {
    %c0_i32 = arith.constant 0 : i32
    %c0_i32_0 = arith.constant 0 : i32
    %c0_i32_1 = arith.constant 0 : i32
    return %c0_i32, %c0_i32_0 : i32, i32
  }
  func.func @transform_10(%arg0: i32) -> (i32, i32, i32) {
    %c0_i32 = arith.constant 0 : i32
    %c0_i32_0 = arith.constant 0 : i32
    %c0_i32_1 = arith.constant 0 : i32
    return %arg0, %c0_i32, %c0_i32_0 : i32, i32, i32
  }
  func.func @transform_11(%arg0: i32) -> (i32, i32, i32) {
    %c0_i32 = arith.constant 0 : i32
    %c0_i32_0 = arith.constant 0 : i32
    %c0_i32_1 = arith.constant 0 : i32
    return %arg0, %c0_i32, %c0_i32_0 : i32, i32, i32
  }
  func.func @transform_12(%arg0: i32) -> (i32, i32) {
    %c0_i32 = arith.constant 0 : i32
    %c0_i32_0 = arith.constant 0 : i32
    return %arg0, %c0_i32 : i32, i32
  }
}

</mosaic_0001>

<llo_original>
// kernel: squeeze.3
$region0: #{squeeze.3}
  %s0 = inlined_call_operand.vmem [shape: f32[16], index: 0, kind: input, shape index: {}]
  %s1 = inlined_call_operand.hbm [shape: f32[2,8,1], index: 1, kind: output, shape index: {}]
  $region1: #{squeeze.3} parent=0
    #allocation0 [shape = 'u8[1024]{0}', space=vmem, size = 0x400, scoped, tag = 'operand span for operand 1']
    #allocation1 [shape = 's32[1]{0}', space=sflag, size = 0x4, scoped, tag = 'scoped memory for squeeze.3']
    #allocation2 [shape = 'u8[4096]{0}', space=vmem, size = 0x1000, scoped, tag = 'scoped mem for output reshape']
    #allocation3 [shape = 'u8[4096]{0}', space=vmem, size = 0x1000, scoped, tag = 'scoped mem for input reshape']
    %2 = vsyncpa [#allocation1], 0
    %s4 = sshllo.u32 0, 1
    %v5 = vld [vmem:[%s0] sm:%s4]
    %6 = vst [vmem:[#allocation3] sm:%s4] %v5
    %v7 = vld [vmem:[#allocation3] sm:$0x1]
    %vm8 = vcmask 64512
    %9 = vst.msk [vmem:[#allocation2] sm:$0x1] %vm8, %v7
    %v10 = vld [vmem:[#allocation3] sm:$0x1]
    %11 = vrot.lane.b32.xlu0 %v10, 120
    %v12 = vpop.permute.xlu0 %11
    %vm13 = vcmask 64512
    %s14 = scalar_lea.vmem [#allocation2], 1
    %15 = vst.msk [vmem:[%s14] sm:$0x1] %vm13, %v12
    %s17 = sshllo.u32 0, 2
    %v19 = vld [vmem:[#allocation2] sm:%s17]
    %s20 = sshllo.u32 0, 2
    %21 = vst [vmem:[#allocation0] sm:%s20] %v19
    %s23 = ssub.s32 32, 32
    %24 = vsyncadd [#allocation1], %s23
    %s26 = sshll.u32 [#allocation0], 4
    %s27 = int_to_ptr.vmem [resolvable:$true] %s26
    %29 = dma.vmem_to_hbm [thread:$0]  %s27, 32, %s1, [#allocation1]
    %30 = dma.done [#allocation1], 32
    %31 = vsyncpa [#allocation1], 1

// kernel: forward.1
$region0: #{forward.1}
  #allocation0 [shape = 'u32[]', space=smem, size = 0x4, offset = 0x4, fixed_abs, tag = 'smem constant byte address 0x4 - core index']
  #allocation1 [shape = 'u32[144,128]{1,0:T(1,128)}', space=vmem, size = 0x12000, scoped, tag = 'internal scratch']
  %s0 = inlined_call_operand.vmem [shape: f32[2,8,32], index: 0, kind: input, shape index: {}]
  %s1 = inlined_call_operand.vmem [shape: f32[2,8,32], index: 1, kind: input, shape index: {}]
  %s2 = inlined_call_operand.vmem [shape: f32[2,1,8], index: 2, kind: input, shape index: {}]
  %s3 = inlined_call_operand.vmem [shape: f32[2,1,8], index: 3, kind: input, shape index: {}]
  %s4 = inlined_call_operand.vmem [shape: s32[2,8,1], index: 4, kind: input, shape index: {}]
  %s5 = inlined_call_operand.vmem [shape: bf16[3,32,128], index: 5, kind: input, shape index: {}]
  %s6 = inlined_call_operand.vmem [shape: bf16[2,32,64], index: 6, kind: input, shape index: {}]
  %s7 = inlined_call_operand.vmem [shape: bf16[2,64,32], index: 7, kind: input, shape index: {}]
  %s8 = inlined_call_operand.vmem [shape: bf16[64,32], index: 8, kind: input, shape index: {}]
  %s9 = inlined_call_operand.vmem [shape: f32[16,128], index: 9, kind: input, shape index: {}]
  %s10 = inlined_call_operand.hbm [shape: f32[2,8,32], index: 10, kind: output, shape index: {0}]
  %s11 = inlined_call_operand.hbm [shape: f32[2,8,64], index: 11, kind: output, shape index: {1}]
  %s12 = inlined_call_operand.vmem [shape: f32[16,128], index: 12, kind: output, shape index: {2}]
  %13 = xla_tuple %s10, %s11, %s12
  %s14 = sld [smem:[#allocation0]]
  $region66: #{forward.1} parent=0
    _
  %s16 = ssub.s32 1, %s14
  %s17 = scalar_select 0, %s16, %s14
  $region1: #{forward.1} parent=0
    #allocation2 [shape = 'u8[8192]{0}', space=vmem, size = 0x2000, scoped, tag = 'output window, operand 0, single buffered']
    #allocation3 [shape = 's32[1]{0}', space=sflag, size = 0x4, scoped, tag = 'scoped memory for forward.1']
    #allocation4 [shape = 'u8[8192]{0}', space=vmem, size = 0x2000, scoped, tag = 'output window, operand 1, single buffered']
    #allocation5 [shape = 's32[1]{0}', space=sflag, size = 0x4, scoped, tag = 'scoped memory for forward.1']
    %18 = vsyncpa [#allocation3], 0
    %19 = vsyncpa [#allocation5], 0
    // Predicated region
    $region2: #{forward.1} parent=1 // pred_check
      _
    $region3: #{forward.1} parent=1 // pred_check_branch
      %21 = sbr.rel (0) target = $region5
    $region4: #{forward.1} parent=1 // pred_region
      _
    $region5: #{forward.1} parent=1 // pred_fallthru
      _
    // Predicated region
    $region6: #{forward.1} parent=1 // pred_check
      _
    $region7: #{forward.1} parent=1 // pred_check_branch
      %23 = sbr.rel (0) target = $region9
    $region8: #{forward.1} parent=1 // pred_region
      _
    $region9: #{forward.1} parent=1 // pred_fallthru
      _
    // Predicated region
    $region10: #{forward.1} parent=1 // pred_check
      _
    $region11: #{forward.1} parent=1 // pred_check_branch
      %25 = sbr.rel (0) target = $region13
    $region12: #{forward.1} parent=1 // pred_region
      _
    $region13: #{forward.1} parent=1 // pred_fallthru
      _
    // Predicated region
    $region14: #{forward.1} parent=1 // pred_check
      _
    $region15: #{forward.1} parent=1 // pred_check_branch
      %27 = sbr.rel (0) target = $region17
    $region16: #{forward.1} parent=1 // pred_region
      _
    $region17: #{forward.1} parent=1 // pred_fallthru
      _
    // Predicated region
    $region18: #{forward.1} parent=1 // pred_check
      _
    $region19: #{forward.1} parent=1 // pred_check_branch
      %29 = sbr.rel (0) target = $region21
    $region20: #{forward.1} parent=1 // pred_region
      _
    $region21: #{forward.1} parent=1 // pred_fallthru
      _
    // Predicated region
    $region22: #{forward.1} parent=1 // pred_check
      _
    $region23: #{forward.1} parent=1 // pred_check_branch
      %31 = sbr.rel (0) target = $region25
    $region24: #{forward.1} parent=1 // pred_region
      _
    $region25: #{forward.1} parent=1 // pred_fallthru
      _
    // Predicated region
    $region26: #{forward.1} parent=1 // pred_check
      _
    $region27: #{forward.1} parent=1 // pred_check_branch
      %33 = sbr.rel (0) target = $region29
    $region28: #{forward.1} parent=1 // pred_region
      _
    $region29: #{forward.1} parent=1 // pred_fallthru
      _
    // Predicated region
    $region30: #{forward.1} parent=1 // pred_check
      _
    $region31: #{forward.1} parent=1 // pred_check_branch
      %35 = sbr.rel (0) target = $region33
    $region32: #{forward.1} parent=1 // pred_region
      _
    $region33: #{forward.1} parent=1 // pred_fallthru
      _
    // Predicated region
    $region34: #{forward.1} parent=1 // pred_check
      _
    $region35: #{forward.1} parent=1 // pred_check_branch
      %37 = sbr.rel (0) target = $region37
    $region36: #{forward.1} parent=1 // pred_region
      _
    $region37: #{forward.1} parent=1 // pred_fallthru
      _
    // Predicated region
    $region38: #{forward.1} parent=1 // pred_check
      _
    $region39: #{forward.1} parent=1 // pred_check_branch
      %39 = sbr.rel (0) target = $region41
    $region40: #{forward.1} parent=1 // pred_region
      _
    $region41: #{forward.1} parent=1 // pred_fallthru
      _
    %v41 = vld [vmem:[%s0] sm:$0xff]
    %v42 = vld [vmem:[%s0 + $0x8] sm:$0xff]
    %v43 = vld [vmem:[%s1] sm:$0xff]
    %v44 = vld [vmem:[%s1 + $0x8] sm:$0xff]
    %v45 = vld [vmem:[%s2] sm:$0x1]
    %v46 = vld [vmem:[%s2 + $0x1] sm:$0x1]
    %v47 = vld [vmem:[%s3] sm:$0x1]
    %v48 = vld [vmem:[%s3 + $0x1] sm:$0x1]
    %v49 = vsub.f32 1.0, %v45
    %v50 = vsub.f32 1.0, %v46
    %v51 = vmul.f32 %v49, -1e+09
    %v52 = vmul.f32 %v50, -1e+09
    %v53 = vlaneseq
    %v54 = vshrl.u32 %v53, 7
    %v55 = vlaneseq
    %v56 = vand.u32 %v55, 127
    %vm57 = vcmp.ge.s32.totalorder %v54, %v56
    %vm58 = vcmp.gt.f32.partialorder %v47, 0.5
    %vm59 = vcmp.gt.f32.partialorder %v48, 0.5
    %v60 = vsel %vm57, 1, 0
    %vm61 = vcmp.eq.s32.totalorder %v60, 1
    %v62 = vsel %vm58, 1, 0
    %v63 = vsel %vm59, 1, 0
    %v64 = vlaneseq
    %v65 = vshrl.u32 %v64, 7
    %v66 = vsub.s32 0, %v65
    %v67 = vrot.slane %v62, %v66
    %v68 = vlaneseq
    %v69 = vshrl.u32 %v68, 7
    %v70 = vsub.s32 0, %v69
    %v71 = vrot.slane %v63, %v70
    %vm72 = vcmp.eq.s32.totalorder %v67, 1
    %vm73 = vcmp.eq.s32.totalorder %v71, 1
    %vm74 = vmand %vm61, %vm72
    %vm75 = vmand %vm61, %vm73
    %v76 = vsel %vm74, 0.0, -1e+09
    %v77 = vsel %vm75, 0.0, -1e+09
    %v78 = vld [vmem:[%s5] sm:$0xf]
    %v79 = vld [vmem:[%s5 + $0x4] sm:$0xf]
    %v80 = vld [vmem:[%s5 + $0x8] sm:$0xf]
    %v81 = vld [vmem:[%s5 + $0xc] sm:$0xf]
    %v82 = vld [vmem:[%s9] sm:$0x1]
    %v83 = vld [vmem:[%s9 + $0x3] sm:$0x1]
    %v84 = vpack.c.bf16 %v42, %v41
    %v85 = vlaneseq
    %v86 = vshrl.u32 %v85, 7
    %v87 = vsub.s32 0, %v86
    %v88 = vrot.slane %v82, %v87
    %v93 = vunpack.c.l.b16 %v78
    %v94 = vunpack.c.l.b16 %v79
    %v95 = vunpack.c.l.b16 %v80
    %v96 = vunpack.c.l.b16 %v81
    %v97 = vpack.c.b16 %v94, %v93
    %v98 = vpack.c.b16 %v96, %v95
    %vm101 = vcmask 261120
    %v103 = vsel %vm101, %v84, 0
    %105 = vmatprep.subr.bf16.mxu0 0
    %106 = vmatpush1.bf16.msra.mxu0 %v97
    %107 = vmatprep.subr.bf16.mxu0 0
    %108 = vmatpush1.bf16.msra.mxu0 %v98
    %109 = vmatprep.subr.bf16.mxu0 0
    %110 = vmatpush1.bf16.msra.mxu0 0
    %111 = vmatprep.subr.bf16.mxu0 0
    %112 = vmatpush1.bf16.msra.mxu0 0
    %113 = vmatprep.subr.bf16.mxu0 0
    %114 = vmatpush1.bf16.msra.mxu0 0
    %115 = vmatprep.subr.bf16.mxu0 0
    %116 = vmatpush1.bf16.msra.mxu0 0
    %117 = vmatprep.subr.bf16.mxu0 0
    %118 = vmatpush1.bf16.msra.mxu0 0
    %119 = vmatprep.subr.bf16.mxu0 0
    %120 = vmatpush1.bf16.msra.mxu0 0
    %121 = vmatprep.subr.bf16.mxu0 0
    %122 = vmatpush1.bf16.msra.mxu0 0
    %123 = vmatprep.subr.bf16.mxu0 0
    %124 = vmatpush1.bf16.msra.mxu0 0
    %125 = vmatprep.subr.bf16.mxu0 0
    %126 = vmatpush1.bf16.msra.mxu0 0
    %127 = vmatprep.subr.bf16.mxu0 0
    %128 = vmatpush1.bf16.msra.mxu0 0
    %129 = vmatprep.subr.bf16.mxu0 0
    %130 = vmatpush1.bf16.msra.mxu0 0
    %131 = vmatprep.subr.bf16.mxu0 0
    %132 = vmatpush1.bf16.msra.mxu0 0
    %133 = vmatprep.subr.bf16.mxu0 0
    %134 = vmatpush1.bf16.msra.mxu0 0
    %135 = vmatprep.subr.bf16.mxu0 0
    %136 = vmatpush1.bf16.msra.mxu0 0
    %137 = vmatprep.mubr.bf16.mxu0 0
    %138 = vmatmul.mubr.bf16.gmra.mrb[0].mxu0 %v103
    %v139 = vpop.f32.mrb[0].mxu0
    %v140 = vadd.f32 %v88, %v139
    %v141 = vpop.f32.mrb[0].mxu0
    %v142 = vpop.f32.mrb[0].mxu0
    %v143 = vadd.f32 %v88, %v142
    %v144 = vpop.f32.mrb[0].mxu0
    %145 = vdwg.mxu0
    %v146 = vpack.c.bf16 %v140, %v140
    %v147 = vpack.c.bf16 %v143, %v143
    %149 = vrot.lane.b32.xlu0 %v146, 96
    %v150 = vpop.permute.xlu0 %149
    %v152 = vsel %vm101, %v146, 0
    %v155 = vsel %vm101, %v150, 0
    %157 = vmatprep.subr.bf16.mxu0 0
    %158 = vmatpush1.bf16.xpose.msra.mxu0 %v155
    %159 = vmatprep.subr.bf16.mxu0 0
    %160 = vmatpush1.bf16.xpose.msra.mxu0 0
    %161 = vmatprep.subr.bf16.mxu0 0
    %162 = vmatpush1.bf16.xpose.msra.mxu0 0
    %163 = vmatprep.subr.bf16.mxu0 0
    %164 = vmatpush1.bf16.xpose.msra.mxu0 0
    %165 = vmatprep.subr.bf16.mxu0 0
    %166 = vmatpush1.bf16.xpose.msra.mxu0 0
    %167 = vmatprep.subr.bf16.mxu0 0
    %168 = vmatpush1.bf16.xpose.msra.mxu0 0
    %169 = vmatprep.subr.bf16.mxu0 0
    %170 = vmatpush1.bf16.xpose.msra.mxu0 0
    %171 = vmatprep.subr.bf16.mxu0 0
    %172 = vmatpush1.bf16.xpose.msra.mxu0 0
    %173 = vmatprep.subr.bf16.mxu0 0
    %174 = vmatpush1.bf16.xpose.msra.mxu0 0
    %175 = vmatprep.subr.bf16.mxu0 0
    %176 = vmatpush1.bf16.xpose.msra.mxu0 0
    %177 = vmatprep.subr.bf16.mxu0 0
    %178 = vmatpush1.bf16.xpose.msra.mxu0 0
    %179 = vmatprep.subr.bf16.mxu0 0
    %180 = vmatpush1.bf16.xpose.msra.mxu0 0
    %181 = vmatprep.subr.bf16.mxu0 0
    %182 = vmatpush1.bf16.xpose.msra.mxu0 0
    %183 = vmatprep.subr.bf16.mxu0 0
    %184 = vmatpush1.bf16.xpose.msra.mxu0 0
    %185 = vmatprep.subr.bf16.mxu0 0
    %186 = vmatpush1.bf16.xpose.msra.mxu0 0
    %187 = vmatprep.subr.bf16.mxu0 0
    %188 = vmatpush1.bf16.xpose.msra.mxu0 0
    %189 = vmatprep.mubr.bf16.mxu0 0
    %190 = vmatmul.mubr.bf16.gmra.mrb[0].mxu0 %v152
    %v191 = vpop.f32.mrb[0].mxu0
    %v192 = vadd.f32 0.0, %v191
    %v193 = vpop.f32.mrb[0].mxu0
    %v194 = vpop.f32.mrb[0].mxu0
    %v195 = vpop.f32.mrb[0].mxu0
    %196 = vdwg.mxu0
    %198 = vrot.lane.b32.xlu0 %v147, 96
    %v199 = vpop.permute.xlu0 %198
    %v201 = vsel %vm101, %v147, 0
    %v204 = vsel %vm101, %v199, 0
    %206 = vmatprep.subr.bf16.mxu0 0
    %207 = vmatpush1.bf16.xpose.msra.mxu0 %v204
    %208 = vmatprep.subr.bf16.mxu0 0
    %209 = vmatpush1.bf16.xpose.msra.mxu0 0
    %210 = vmatprep.subr.bf16.mxu0 0
    %211 = vmatpush1.bf16.xpose.msra.mxu0 0
    %212 = vmatprep.subr.bf16.mxu0 0
    %213 = vmatpush1.bf16.xpose.msra.mxu0 0
    %214 = vmatprep.subr.bf16.mxu0 0
    %215 = vmatpush1.bf16.xpose.msra.mxu0 0
    %216 = vmatprep.subr.bf16.mxu0 0
    %217 = vmatpush1.bf16.xpose.msra.mxu0 0
    %218 = vmatprep.subr.bf16.mxu0 0
    %219 = vmatpush1.bf16.xpose.msra.mxu0 0
    %220 = vmatprep.subr.bf16.mxu0 0
    %221 = vmatpush1.bf16.xpose.msra.mxu0 0
    %222 = vmatprep.subr.bf16.mxu0 0
    %223 = vmatpush1.bf16.xpose.msra.mxu0 0
    %224 = vmatprep.subr.bf16.mxu0 0
    %225 = vmatpush1.bf16.xpose.msra.mxu0 0
    %226 = vmatprep.subr.bf16.mxu0 0
    %227 = vmatpush1.bf16.xpose.msra.mxu0 0
    %228 = vmatprep.subr.bf16.mxu0 0
    %229 = vmatpush1.bf16.xpose.msra.mxu0 0
    %230 = vmatprep.subr.bf16.mxu0 0
    %231 = vmatpush1.bf16.xpose.msra.mxu0 0
    %232 = vmatprep.subr.bf16.mxu0 0
    %233 = vmatpush1.bf16.xpose.msra.mxu0 0
    %234 = vmatprep.subr.bf16.mxu0 0
    %235 = vmatpush1.bf16.xpose.msra.mxu0 0
    %236 = vmatprep.subr.bf16.mxu0 0
    %237 = vmatpush1.bf16.xpose.msra.mxu0 0
    %238 = vmatprep.mubr.bf16.mxu0 0
    %239 = vmatmul.mubr.bf16.gmra.mrb[0].mxu0 %v201
    %v240 = vpop.f32.mrb[0].mxu0
    %v241 = vadd.f32 0.0, %v240
    %v242 = vpop.f32.mrb[0].mxu0
    %v243 = vpop.f32.mrb[0].mxu0
    %v244 = vpop.f32.mrb[0].mxu0
    %245 = vdwg.mxu0
    %v246 = vmul.f32 %v192, 0.17677669
    %v247 = vmul.f32 %v241, 0.17677669
    %v250 = vlaneseq
    %v251 = vshrl.u32 %v250, 7
    %v252 = vsub.s32 0, %v251
    %v253 = vrot.slane %v51, %v252
    %v254 = vlaneseq
    %v255 = vshrl.u32 %v254, 7
    %v256 = vsub.s32 0, %v255
    %v257 = vrot.slane %v52, %v256
    %v260 = vadd.f32 %v246, %v253
    %v261 = vadd.f32 %v247, %v257
    %vm262 = vcmask 64512
    %v263 = vsel %vm262, %v260, -inf
    %264 = vmax.xlane.f32.xlu0 %v263
    %v265 = vpop.xlane.xlu0 %264
    %v266 = vsel %vm262, %v261, -inf
    %267 = vmax.xlane.f32.xlu0 %v266
    %v268 = vpop.xlane.xlu0 %267
    %v269 = vsub.f32 %v260, %v265
    %v270 = vsub.f32 %v261, %v268
    %v271 = vmul.f32 %v269, 1.442695
    %v272 = vpow.pop %v271
    %v273 = vmul.f32 %v270, 1.442695
    %v274 = vpow.pop %v273
    %v275 = vsel %vm262, %v272, 0.0
    %276 = vadd.xlane.f32.xlu0 %v275
    %v277 = vpop.xlane.xlu0 %276
    %v278 = vsel %vm262, %v274, 0.0
    %279 = vadd.xlane.f32.xlu0 %v278
    %v280 = vpop.xlane.xlu0 %279
    %v281 = vmax.f32 %v277, 1e-20
    %v282 = vmax.f32 %v280, 1e-20
    %v283 = vrcp.pop %v281
    %v284 = vrcp.pop %v282
    %v285 = vmul.f32 %v272, %v283
    %v286 = vmul.f32 %v274, %v284
    %v287 = vpack.c.bf16 %v285, %v285
    %v288 = vpack.c.bf16 %v286, %v286
    %289 = vrot.lane.b32.xlu0 %v146, 64
    %v290 = vpop.permute.xlu0 %289
    %v292 = vsel %vm262, %v287, 0
    %vm294 = vcmask 1043456
    %v296 = vsel %vm294, %v290, 0
    %298 = vmatprep.subr.bf16.mxu0 0
    %299 = vmatpush1.bf16.msra.mxu0 %v296
    %300 = vmatprep.subr.bf16.mxu0 0
    %301 = vmatpush1.bf16.msra.mxu0 0
    %302 = vmatprep.subr.bf16.mxu0 0
    %303 = vmatpush1.bf16.msra.mxu0 0
    %304 = vmatprep.subr.bf16.mxu0 0
    %305 = vmatpush1.bf16.msra.mxu0 0
    %306 = vmatprep.subr.bf16.mxu0 0
    %307 = vmatpush1.bf16.msra.mxu0 0
    %308 = vmatprep.subr.bf16.mxu0 0
    %309 = vmatpush1.bf16.msra.mxu0 0
    %310 = vmatprep.subr.bf16.mxu0 0
    %311 = vmatpush1.bf16.msra.mxu0 0
    %312 = vmatprep.subr.bf16.mxu0 0
    %313 = vmatpush1.bf16.msra.mxu0 0
    %314 = vmatprep.subr.bf16.mxu0 0
    %315 = vmatpush1.bf16.msra.mxu0 0
    %316 = vmatprep.subr.bf16.mxu0 0
    %317 = vmatpush1.bf16.msra.mxu0 0
    %318 = vmatprep.subr.bf16.mxu0 0
    %319 = vmatpush1.bf16.msra.mxu0 0
    %320 = vmatprep.subr.bf16.mxu0 0
    %321 = vmatpush1.bf16.msra.mxu0 0
    %322 = vmatprep.subr.bf16.mxu0 0
    %323 = vmatpush1.bf16.msra.mxu0 0
    %324 = vmatprep.subr.bf16.mxu0 0
    %325 = vmatpush1.bf16.msra.mxu0 0
    %326 = vmatprep.subr.bf16.mxu0 0
    %327 = vmatpush1.bf16.msra.mxu0 0
    %328 = vmatprep.subr.bf16.mxu0 0
    %329 = vmatpush1.bf16.msra.mxu0 0
    %330 = vmatprep.mubr.bf16.mxu0 0
    %331 = vmatmul.mubr.bf16.gmra.mrb[0].mxu0 %v292
    %v332 = vpop.f32.mrb[0].mxu0
    %v333 = vadd.f32 0.0, %v332
    %v334 = vpop.f32.mrb[0].mxu0
    %v335 = vpop.f32.mrb[0].mxu0
    %v336 = vpop.f32.mrb[0].mxu0
    %337 = vdwg.mxu0
    %338 = vrot.lane.b32.xlu0 %v147, 64
    %v339 = vpop.permute.xlu0 %338
    %v341 = vsel %vm262, %v288, 0
    %v344 = vsel %vm294, %v339, 0
    %346 = vmatprep.subr.bf16.mxu0 0
    %347 = vmatpush1.bf16.msra.mxu0 %v344
    %348 = vmatprep.subr.bf16.mxu0 0
    %349 = vmatpush1.bf16.msra.mxu0 0
    %350 = vmatprep.subr.bf16.mxu0 0
    %351 = vmatpush1.bf16.msra.mxu0 0
    %352 = vmatprep.subr.bf16.mxu0 0
    %353 = vmatpush1.bf16.msra.mxu0 0
    %354 = vmatprep.subr.bf16.mxu0 0
    %355 = vmatpush1.bf16.msra.mxu0 0
    %356 = vmatprep.subr.bf16.mxu0 0
    %357 = vmatpush1.bf16.msra.mxu0 0
    %358 = vmatprep.subr.bf16.mxu0 0
    %359 = vmatpush1.bf16.msra.mxu0 0
    %360 = vmatprep.subr.bf16.mxu0 0
    %361 = vmatpush1.bf16.msra.mxu0 0
    %362 = vmatprep.subr.bf16.mxu0 0
    %363 = vmatpush1.bf16.msra.mxu0 0
    %364 = vmatprep.subr.bf16.mxu0 0
    %365 = vmatpush1.bf16.msra.mxu0 0
    %366 = vmatprep.subr.bf16.mxu0 0
    %367 = vmatpush1.bf16.msra.mxu0 0
    %368 = vmatprep.subr.bf16.mxu0 0
    %369 = vmatpush1.bf16.msra.mxu0 0
    %370 = vmatprep.subr.bf16.mxu0 0
    %371 = vmatpush1.bf16.msra.mxu0 0
    %372 = vmatprep.subr.bf16.mxu0 0
    %373 = vmatpush1.bf16.msra.mxu0 0
    %374 = vmatprep.subr.bf16.mxu0 0
    %375 = vmatpush1.bf16.msra.mxu0 0
    %376 = vmatprep.subr.bf16.mxu0 0
    %377 = vmatpush1.bf16.msra.mxu0 0
    %378 = vmatprep.mubr.bf16.mxu0 0
    %379 = vmatmul.mubr.bf16.gmra.mrb[0].mxu0 %v341
    %v380 = vpop.f32.mrb[0].mxu0
    %v381 = vadd.f32 0.0, %v380
    %v382 = vpop.f32.mrb[0].mxu0
    %v383 = vpop.f32.mrb[0].mxu0
    %v384 = vpop.f32.mrb[0].mxu0
    %385 = vdwg.mxu0
    %v386 = vpack.c.bf16 %v381, %v333
    %387 = vrot.lane.b32.xlu0 %v97, 32
    %v388 = vpop.permute.xlu0 %387
    %389 = vrot.lane.b32.xlu0 %v98, 32
    %v390 = vpop.permute.xlu0 %389
    %394 = vrot.lane.b32.xlu0 %v88, 32
    %v395 = vpop.permute.xlu0 %394
    %v398 = vsel %vm101, %v386, 0
    %400 = vmatprep.subr.bf16.mxu0 0
    %401 = vmatpush1.bf16.msra.mxu0 %v388
    %402 = vmatprep.subr.bf16.mxu0 0
    %403 = vmatpush1.bf16.msra.mxu0 %v390
    %404 = vmatprep.subr.bf16.mxu0 0
    %405 = vmatpush1.bf16.msra.mxu0 0
    %406 = vmatprep.subr.bf16.mxu0 0
    %407 = vmatpush1.bf16.msra.mxu0 0
    %408 = vmatprep.subr.bf16.mxu0 0
    %409 = vmatpush1.bf16.msra.mxu0 0
    %410 = vmatprep.subr.bf16.mxu0 0
    %411 = vmatpush1.bf16.msra.mxu0 0
    %412 = vmatprep.subr.bf16.mxu0 0
    %413 = vmatpush1.bf16.msra.mxu0 0
    %414 = vmatprep.subr.bf16.mxu0 0
    %415 = vmatpush1.bf16.msra.mxu0 0
    %416 = vmatprep.subr.bf16.mxu0 0
    %417 = vmatpush1.bf16.msra.mxu0 0
    %418 = vmatprep.subr.bf16.mxu0 0
    %419 = vmatpush1.bf16.msra.mxu0 0
    %420 = vmatprep.subr.bf16.mxu0 0
    %421 = vmatpush1.bf16.msra.mxu0 0
    %422 = vmatprep.subr.bf16.mxu0 0
    %423 = vmatpush1.bf16.msra.mxu0 0
    %424 = vmatprep.subr.bf16.mxu0 0
    %425 = vmatpush1.bf16.msra.mxu0 0
    %426 = vmatprep.subr.bf16.mxu0 0
    %427 = vmatpush1.bf16.msra.mxu0 0
    %428 = vmatprep.subr.bf16.mxu0 0
    %429 = vmatpush1.bf16.msra.mxu0 0
    %430 = vmatprep.subr.bf16.mxu0 0
    %431 = vmatpush1.bf16.msra.mxu0 0
    %432 = vmatprep.mubr.bf16.mxu0 0
    %433 = vmatmul.mubr.bf16.gmra.mrb[0].mxu0 %v398
    %v434 = vpop.f32.mrb[0].mxu0
    %v435 = vadd.f32 %v395, %v434
    %v436 = vpop.f32.mrb[0].mxu0
    %v437 = vpop.f32.mrb[0].mxu0
    %v438 = vadd.f32 %v395, %v437
    %v439 = vpop.f32.mrb[0].mxu0
    %440 = vdwg.mxu0
    %v441 = vadd.f32 %v41, %v435
    %v442 = vadd.f32 %v42, %v438
    %v443 = vsel %vm101, %v441, 0.0
    %444 = vadd.xlane.f32.xlu0 %v443
    %v445 = vpop.xlane.xlu0 %444
    %v446 = vsel %vm101, %v442, 0.0
    %447 = vadd.xlane.f32.xlu0 %v446
    %v448 = vpop.xlane.xlu0 %447
    %v449 = vrcp.pop 32.0
    %v450 = vmul.f32 %v445, %v449
    %v451 = vmul.f32 %v448, %v449
    %v452 = vsub.f32 %v441, %v450
    %v453 = vsub.f32 %v442, %v451
    %v454 = vmul.f32 %v452, %v452
    %v455 = vmul.f32 %v453, %v453
    %v456 = vsel %vm101, %v454, 0.0
    %457 = vadd.xlane.f32.xlu0 %v456
    %v458 = vpop.xlane.xlu0 %457
    %v459 = vsel %vm101, %v455, 0.0
    %460 = vadd.xlane.f32.xlu0 %v459
    %v461 = vpop.xlane.xlu0 %460
    %v462 = vmul.f32 %v458, %v449
    %v463 = vmul.f32 %v461, %v449
    %v464 = vadd.f32 %v462, 1e-05
    %v465 = vadd.f32 %v463, 1e-05
    %v466 = vrsqrt.pop %v464
    %v467 = vrsqrt.pop %v465
    %v468 = vmul.f32 %v452, %v466
    %v469 = vmul.f32 %v453, %v467
    %v470 = vlaneseq
    %v471 = vshrl.u32 %v470, 7
    %v472 = vsub.s32 0, %v471
    %v473 = vrot.slane %v83, %v472
    %v474 = vmul.f32 %v468, %v473
    %v475 = vmul.f32 %v469, %v473
    %477 = vrot.lane.b32.xlu0 %v473, 96
    %v478 = vpop.permute.xlu0 %477
    %v480 = vadd.f32 %v474, %v478
    %v481 = vadd.f32 %v475, %v478
    %v482 = vld [vmem:[%s6] sm:$0xf]
    %v483 = vld [vmem:[%s6 + $0x4] sm:$0xf]
    %v484 = vld [vmem:[%s6 + $0x8] sm:$0xf]
    %v485 = vld [vmem:[%s6 + $0xc] sm:$0xf]
    %v486 = vld [vmem:[%s7] sm:$0xf]
    %v487 = vld [vmem:[%s7 + $0x4] sm:$0xf]
    %v488 = vld [vmem:[%s7 + $0x8] sm:$0xf]
    %v489 = vld [vmem:[%s7 + $0xc] sm:$0xf]
    %v490 = vld [vmem:[%s7 + $0x10] sm:$0xf]
    %v491 = vld [vmem:[%s7 + $0x14] sm:$0xf]
    %v492 = vld [vmem:[%s7 + $0x18] sm:$0xf]
    %v493 = vld [vmem:[%s7 + $0x1c] sm:$0xf]
    %v494 = vld [vmem:[%s9 + $0x6] sm:$0x1]
    %v495 = vld [vmem:[%s9 + $0x8] sm:$0x1]
    %v496 = vpack.c.bf16 %v481, %v480
    %v497 = vlaneseq
    %v498 = vshrl.u32 %v497, 7
    %v499 = vsub.s32 0, %v498
    %v500 = vrot.slane %v494, %v499
    %v505 = vunpack.c.l.b16 %v482
    %v506 = vunpack.c.l.b16 %v483
    %v507 = vunpack.c.l.b16 %v484
    %v508 = vunpack.c.l.b16 %v485
    %v509 = vpack.c.b16 %v506, %v505
    %v510 = vpack.c.b16 %v508, %v507
    %v514 = vsel %vm101, %v496, 0
    %516 = vmatprep.subr.bf16.mxu0 0
    %517 = vmatpush1.bf16.msra.mxu0 %v509
    %518 = vmatprep.subr.bf16.mxu0 0
    %519 = vmatpush1.bf16.msra.mxu0 %v510
    %520 = vmatprep.subr.bf16.mxu0 0
    %521 = vmatpush1.bf16.msra.mxu0 0
    %522 = vmatprep.subr.bf16.mxu0 0
    %523 = vmatpush1.bf16.msra.mxu0 0
    %524 = vmatprep.subr.bf16.mxu0 0
    %525 = vmatpush1.bf16.msra.mxu0 0
    %526 = vmatprep.subr.bf16.mxu0 0
    %527 = vmatpush1.bf16.msra.mxu0 0
    %528 = vmatprep.subr.bf16.mxu0 0
    %529 = vmatpush1.bf16.msra.mxu0 0
    %530 = vmatprep.subr.bf16.mxu0 0
    %531 = vmatpush1.bf16.msra.mxu0 0
    %532 = vmatprep.subr.bf16.mxu0 0
    %533 = vmatpush1.bf16.msra.mxu0 0
    %534 = vmatprep.subr.bf16.mxu0 0
    %535 = vmatpush1.bf16.msra.mxu0 0
    %536 = vmatprep.subr.bf16.mxu0 0
    %537 = vmatpush1.bf16.msra.mxu0 0
    %538 = vmatprep.subr.bf16.mxu0 0
    %539 = vmatpush1.bf16.msra.mxu0 0
    %540 = vmatprep.subr.bf16.mxu0 0
    %541 = vmatpush1.bf16.msra.mxu0 0
    %542 = vmatprep.subr.bf16.mxu0 0
    %543 = vmatpush1.bf16.msra.mxu0 0
    %544 = vmatprep.subr.bf16.mxu0 0
    %545 = vmatpush1.bf16.msra.mxu0 0
    %546 = vmatprep.subr.bf16.mxu0 0
    %547 = vmatpush1.bf16.msra.mxu0 0
    %548 = vmatprep.mubr.bf16.mxu0 0
    %549 = vmatmul.mubr.bf16.gmra.mrb[0].mxu0 %v514
    %v550 = vpop.f32.mrb[0].mxu0
    %v551 = vadd.f32 %v500, %v550
    %v552 = vpop.f32.mrb[0].mxu0
    %v553 = vpop.f32.mrb[0].mxu0
    %v554 = vadd.f32 %v500, %v553
    %v555 = vpop.f32.mrb[0].mxu0
    %556 = vdwg.mxu0
    %v557 = vmul.f32 %v551, %v551
    %v558 = vmul.f32 %v554, %v554
    %v559 = vmul.f32 %v551, %v557
    %v560 = vmul.f32 %v554, %v558
    %v561 = vmul.f32 %v559, 0.044715
    %v562 = vmul.f32 %v560, 0.044715
    %v563 = vadd.f32 %v551, %v561
    %v564 = vadd.f32 %v554, %v562
    %v565 = vmul.f32 %v563, 0.7978846
    %v566 = vmul.f32 %v564, 0.7978846
    %v567 = vtanh.pop %v565
    %v568 = vtanh.pop %v566
    %v569 = vadd.f32 %v567, 1.0
    %v570 = vadd.f32 %v568, 1.0
    %v571 = vmul.f32 %v569, 0.5
    %v572 = vmul.f32 %v570, 0.5
    %v573 = vmul.f32 %v551, %v571
    %v574 = vmul.f32 %v554, %v572
    %v575 = vpack.c.bf16 %v574, %v573
    %v576 = vlaneseq
    %v577 = vshrl.u32 %v576, 7
    %v578 = vsub.s32 0, %v577
    %v579 = vrot.slane %v495, %v578
    %v588 = vunpack.c.l.b16 %v486
    %v589 = vunpack.c.l.b16 %v487
    %v590 = vunpack.c.l.b16 %v488
    %v591 = vunpack.c.l.b16 %v489
    %v592 = vunpack.c.l.b16 %v490
    %v593 = vunpack.c.l.b16 %v491
    %v594 = vunpack.c.l.b16 %v492
    %v595 = vunpack.c.l.b16 %v493
    %v596 = vpack.c.b16 %v589, %v588
    %v597 = vpack.c.b16 %v591, %v590
    %v598 = vpack.c.b16 %v593, %v592
    %v599 = vpack.c.b16 %v595, %v594
    %vm604 = vcmask 523264
    %v606 = vsel %vm604, %v575, 0
    %608 = vmatprep.subr.bf16.mxu0 0
    %609 = vmatpush1.bf16.msra.mxu0 %v596
    %610 = vmatprep.subr.bf16.mxu0 0
    %611 = vmatpush1.bf16.msra.mxu0 %v597
    %612 = vmatprep.subr.bf16.mxu0 0
    %613 = vmatpush1.bf16.msra.mxu0 %v598
    %614 = vmatprep.subr.bf16.mxu0 0
    %615 = vmatpush1.bf16.msra.mxu0 %v599
    %616 = vmatprep.subr.bf16.mxu0 0
    %617 = vmatpush1.bf16.msra.mxu0 0
    %618 = vmatprep.subr.bf16.mxu0 0
    %619 = vmatpush1.bf16.msra.mxu0 0
    %620 = vmatprep.subr.bf16.mxu0 0
    %621 = vmatpush1.bf16.msra.mxu0 0
    %622 = vmatprep.subr.bf16.mxu0 0
    %623 = vmatpush1.bf16.msra.mxu0 0
    %624 = vmatprep.subr.bf16.mxu0 0
    %625 = vmatpush1.bf16.msra.mxu0 0
    %626 = vmatprep.subr.bf16.mxu0 0
    %627 = vmatpush1.bf16.msra.mxu0 0
    %628 = vmatprep.subr.bf16.mxu0 0
    %629 = vmatpush1.bf16.msra.mxu0 0
    %630 = vmatprep.subr.bf16.mxu0 0
    %631 = vmatpush1.bf16.msra.mxu0 0
    %632 = vmatprep.subr.bf16.mxu0 0
    %633 = vmatpush1.bf16.msra.mxu0 0
    %634 = vmatprep.subr.bf16.mxu0 0
    %635 = vmatpush1.bf16.msra.mxu0 0
    %636 = vmatprep.subr.bf16.mxu0 0
    %637 = vmatpush1.bf16.msra.mxu0 0
    %638 = vmatprep.subr.bf16.mxu0 0
    %639 = vmatpush1.bf16.msra.mxu0 0
    %640 = vmatprep.mubr.bf16.mxu0 0
    %641 = vmatmul.mubr.bf16.gmra.mrb[0].mxu0 %v606
    %v642 = vpop.f32.mrb[0].mxu0
    %v643 = vadd.f32 %v579, %v642
    %v644 = vpop.f32.mrb[0].mxu0
    %v645 = vpop.f32.mrb[0].mxu0
    %v646 = vadd.f32 %v579, %v645
    %v647 = vpop.f32.mrb[0].mxu0
    %648 = vdwg.mxu0
    %v649 = vadd.f32 %v480, %v643
    %v650 = vadd.f32 %v481, %v646
    %v651 = vsel %vm101, %v649, 0.0
    %652 = vadd.xlane.f32.xlu0 %v651
    %v653 = vpop.xlane.xlu0 %652
    %v654 = vsel %vm101, %v650, 0.0
    %655 = vadd.xlane.f32.xlu0 %v654
    %v656 = vpop.xlane.xlu0 %655
    %v657 = vmul.f32 %v653, %v449
    %v658 = vmul.f32 %v656, %v449
    %v659 = vsub.f32 %v649, %v657
    %v660 = vsub.f32 %v650, %v658
    %v661 = vmul.f32 %v659, %v659
    %v662 = vmul.f32 %v660, %v660
    %v663 = vsel %vm101, %v661, 0.0
    %664 = vadd.xlane.f32.xlu0 %v663
    %v665 = vpop.xlane.xlu0 %664
    %v666 = vsel %vm101, %v662, 0.0
    %667 = vadd.xlane.f32.xlu0 %v666
    %v668 = vpop.xlane.xlu0 %667
    %v669 = vmul.f32 %v665, %v449
    %v670 = vmul.f32 %v668, %v449
    %v671 = vadd.f32 %v669, 1e-05
    %v672 = vadd.f32 %v670, 1e-05
    %v673 = vrsqrt.pop %v671
    %v674 = vrsqrt.pop %v672
    %v675 = vmul.f32 %v659, %v673
    %v676 = vmul.f32 %v660, %v674
    %678 = vrot.lane.b32.xlu0 %v579, 96
    %v679 = vpop.permute.xlu0 %678
    %v681 = vmul.f32 %v675, %v679
    %v682 = vmul.f32 %v676, %v679
    %683 = vrot.lane.b32.xlu0 %v579, 64
    %v684 = vpop.permute.xlu0 %683
    %v686 = vadd.f32 %v681, %v684
    %v687 = vadd.f32 %v682, %v684
    %688 = vst.msk [vmem:[#allocation2] sm:$0xff] %vm101, %v686
    %689 = vst.msk [vmem:[#allocation2 + $0x8] sm:$0xff] %vm101, %v687
    %v690 = vld [vmem:[%s9 + $0xb] sm:$0x1]
    %v691 = vlaneseq
    %v692 = vshrl.u32 %v691, 7
    %v693 = vsub.s32 0, %v692
    %v694 = vrot.slane %v690, %v693
    %v695 = vmul.f32 %v686, %v694
    %v696 = vmul.f32 %v687, %v694
    %v697 = vsel %vm101, %v695, 0.0
    %698 = vadd.xlane.f32.xlu0 %v697
    %v699 = vpop.xlane.xlu0 %698
    %v700 = vsel %vm101, %v696, 0.0
    %701 = vadd.xlane.f32.xlu0 %v700
    %v702 = vpop.xlane.xlu0 %701
    %v703 = vadd.f32 %v699, %v694
    %v704 = vadd.f32 %v702, %v694
    %v705 = vxor.u32 %v703, 2147483648
    %v706 = vxor.u32 %v704, 2147483648
    %v707 = vmul.f32 %v705, 1.442695
    %v708 = vpow.pop %v707
    %v709 = vmul.f32 %v706, 1.442695
    %v710 = vpow.pop %v709
    %v711 = vadd.f32 %v708, 1.0
    %v712 = vadd.f32 %v710, 1.0
    %v713 = vrcp.pop %v711
    %v714 = vmul.f32 1.0, %v713
    %v715 = vrcp.pop %v712
    %v716 = vmul.f32 1.0, %v715
    %s717 = scalar_lea.vmem %s5, 16
    %v718 = vld [vmem:[%s717] sm:$0xf]
    %v719 = vld [vmem:[%s717 + $0x4] sm:$0xf]
    %v720 = vld [vmem:[%s717 + $0x8] sm:$0xf]
    %v721 = vld [vmem:[%s717 + $0xc] sm:$0xf]
    %v722 = vld [vmem:[%s9 + $0x1] sm:$0x1]
    %v723 = vld [vmem:[%s9 + $0x4] sm:$0x1]
    %v724 = vpack.c.bf16 %v44, %v43
    %v725 = vlaneseq
    %v726 = vshrl.u32 %v725, 7
    %v727 = vsub.s32 0, %v726
    %v728 = vrot.slane %v722, %v727
    %v733 = vunpack.c.l.b16 %v718
    %v734 = vunpack.c.l.b16 %v719
    %v735 = vunpack.c.l.b16 %v720
    %v736 = vunpack.c.l.b16 %v721
    %v737 = vpack.c.b16 %v734, %v733
    %v738 = vpack.c.b16 %v736, %v735
    %v742 = vsel %vm101, %v724, 0
    %744 = vmatprep.subr.bf16.mxu0 0
    %745 = vmatpush1.bf16.msra.mxu0 %v737
    %746 = vmatprep.subr.bf16.mxu0 0
    %747 = vmatpush1.bf16.msra.mxu0 %v738
    %748 = vmatprep.subr.bf16.mxu0 0
    %749 = vmatpush1.bf16.msra.mxu0 0
    %750 = vmatprep.subr.bf16.mxu0 0
    %751 = vmatpush1.bf16.msra.mxu0 0
    %752 = vmatprep.subr.bf16.mxu0 0
    %753 = vmatpush1.bf16.msra.mxu0 0
    %754 = vmatprep.subr.bf16.mxu0 0
    %755 = vmatpush1.bf16.msra.mxu0 0
    %756 = vmatprep.subr.bf16.mxu0 0
    %757 = vmatpush1.bf16.msra.mxu0 0
    %758 = vmatprep.subr.bf16.mxu0 0
    %759 = vmatpush1.bf16.msra.mxu0 0
    %760 = vmatprep.subr.bf16.mxu0 0
    %761 = vmatpush1.bf16.msra.mxu0 0
    %762 = vmatprep.subr.bf16.mxu0 0
    %763 = vmatpush1.bf16.msra.mxu0 0
    %764 = vmatprep.subr.bf16.mxu0 0
    %765 = vmatpush1.bf16.msra.mxu0 0
    %766 = vmatprep.subr.bf16.mxu0 0
    %767 = vmatpush1.bf16.msra.mxu0 0
    %768 = vmatprep.subr.bf16.mxu0 0
    %769 = vmatpush1.bf16.msra.mxu0 0
    %770 = vmatprep.subr.bf16.mxu0 0
    %771 = vmatpush1.bf16.msra.mxu0 0
    %772 = vmatprep.subr.bf16.mxu0 0
    %773 = vmatpush1.bf16.msra.mxu0 0
    %774 = vmatprep.subr.bf16.mxu0 0
    %775 = vmatpush1.bf16.msra.mxu0 0
    %776 = vmatprep.mubr.bf16.mxu0 0
    %777 = vmatmul.mubr.bf16.gmra.mrb[0].mxu0 %v742
    %v778 = vpop.f32.mrb[0].mxu0
    %v779 = vadd.f32 %v728, %v778
    %v780 = vpop.f32.mrb[0].mxu0
    %v781 = vpop.f32.mrb[0].mxu0
    %v782 = vadd.f32 %v728, %v781
    %v783 = vpop.f32.mrb[0].mxu0
    %784 = vdwg.mxu0
    %v785 = vpack.c.bf16 %v779, %v779
    %v786 = vpack.c.bf16 %v782, %v782
    %788 = vrot.lane.b32.xlu0 %v785, 96
    %v789 = vpop.permute.xlu0 %788
    %v791 = vsel %vm101, %v785, 0
    %v794 = vsel %vm101, %v789, 0
    %796 = vmatprep.subr.bf16.mxu0 0
    %797 = vmatpush1.bf16.xpose.msra.mxu0 %v794
    %798 = vmatprep.subr.bf16.mxu0 0
    %799 = vmatpush1.bf16.xpose.msra.mxu0 0
    %800 = vmatprep.subr.bf16.mxu0 0
    %801 = vmatpush1.bf16.xpose.msra.mxu0 0
    %802 = vmatprep.subr.bf16.mxu0 0
    %803 = vmatpush1.bf16.xpose.msra.mxu0 0
    %804 = vmatprep.subr.bf16.mxu0 0
    %805 = vmatpush1.bf16.xpose.msra.mxu0 0
    %806 = vmatprep.subr.bf16.mxu0 0
    %807 = vmatpush1.bf16.xpose.msra.mxu0 0
    %808 = vmatprep.subr.bf16.mxu0 0
    %809 = vmatpush1.bf16.xpose.msra.mxu0 0
    %810 = vmatprep.subr.bf16.mxu0 0
    %811 = vmatpush1.bf16.xpose.msra.mxu0 0
    %812 = vmatprep.subr.bf16.mxu0 0
    %813 = vmatpush1.bf16.xpose.msra.mxu0 0
    %814 = vmatprep.subr.bf16.mxu0 0
    %815 = vmatpush1.bf16.xpose.msra.mxu0 0
    %816 = vmatprep.subr.bf16.mxu0 0
    %817 = vmatpush1.bf16.xpose.msra.mxu0 0
    %818 = vmatprep.subr.bf16.mxu0 0
    %819 = vmatpush1.bf16.xpose.msra.mxu0 0
    %820 = vmatprep.subr.bf16.mxu0 0
    %821 = vmatpush1.bf16.xpose.msra.mxu0 0
    %822 = vmatprep.subr.bf16.mxu0 0
    %823 = vmatpush1.bf16.xpose.msra.mxu0 0
    %824 = vmatprep.subr.bf16.mxu0 0
    %825 = vmatpush1.bf16.xpose.msra.mxu0 0
    %826 = vmatprep.subr.bf16.mxu0 0
    %827 = vmatpush1.bf16.xpose.msra.mxu0 0
    %828 = vmatprep.mubr.bf16.mxu0 0
    %829 = vmatmul.mubr.bf16.gmra.mrb[0].mxu0 %v791
    %v830 = vpop.f32.mrb[0].mxu0
    %v831 = vadd.f32 0.0, %v830
    %v832 = vpop.f32.mrb[0].mxu0
    %v833 = vpop.f32.mrb[0].mxu0
    %v834 = vpop.f32.mrb[0].mxu0
    %835 = vdwg.mxu0
    %837 = vrot.lane.b32.xlu0 %v786, 96
    %v838 = vpop.permute.xlu0 %837
    %v840 = vsel %vm101, %v786, 0
    %v843 = vsel %vm101, %v838, 0
    %845 = vmatprep.subr.bf16.mxu0 0
    %846 = vmatpush1.bf16.xpose.msra.mxu0 %v843
    %847 = vmatprep.subr.bf16.mxu0 0
    %848 = vmatpush1.bf16.xpose.msra.mxu0 0
    %849 = vmatprep.subr.bf16.mxu0 0
    %850 = vmatpush1.bf16.xpose.msra.mxu0 0
    %851 = vmatprep.subr.bf16.mxu0 0
    %852 = vmatpush1.bf16.xpose.msra.mxu0 0
    %853 = vmatprep.subr.bf16.mxu0 0
    %854 = vmatpush1.bf16.xpose.msra.mxu0 0
    %855 = vmatprep.subr.bf16.mxu0 0
    %856 = vmatpush1.bf16.xpose.msra.mxu0 0
    %857 = vmatprep.subr.bf16.mxu0 0
    %858 = vmatpush1.bf16.xpose.msra.mxu0 0
    %859 = vmatprep.subr.bf16.mxu0 0
    %860 = vmatpush1.bf16.xpose.msra.mxu0 0
    %861 = vmatprep.subr.bf16.mxu0 0
    %862 = vmatpush1.bf16.xpose.msra.mxu0 0
    %863 = vmatprep.subr.bf16.mxu0 0
    %864 = vmatpush1.bf16.xpose.msra.mxu0 0
    %865 = vmatprep.subr.bf16.mxu0 0
    %866 = vmatpush1.bf16.xpose.msra.mxu0 0
    %867 = vmatprep.subr.bf16.mxu0 0
    %868 = vmatpush1.bf16.xpose.msra.mxu0 0
    %869 = vmatprep.subr.bf16.mxu0 0
    %870 = vmatpush1.bf16.xpose.msra.mxu0 0
    %871 = vmatprep.subr.bf16.mxu0 0
    %872 = vmatpush1.bf16.xpose.msra.mxu0 0
    %873 = vmatprep.subr.bf16.mxu0 0
    %874 = vmatpush1.bf16.xpose.msra.mxu0 0
    %875 = vmatprep.subr.bf16.mxu0 0
    %876 = vmatpush1.bf16.xpose.msra.mxu0 0
    %877 = vmatprep.mubr.bf16.mxu0 0
    %878 = vmatmul.mubr.bf16.gmra.mrb[0].mxu0 %v840
    %v879 = vpop.f32.mrb[0].mxu0
    %v880 = vadd.f32 0.0, %v879
    %v881 = vpop.f32.mrb[0].mxu0
    %v882 = vpop.f32.mrb[0].mxu0
    %v883 = vpop.f32.mrb[0].mxu0
    %884 = vdwg.mxu0
    %v885 = vmul.f32 %v831, 0.17677669
    %v886 = vmul.f32 %v880, 0.17677669
    %v887 = vadd.f32 %v885, %v76
    %v888 = vadd.f32 %v886, %v77
    %v889 = vsel %vm262, %v887, -inf
    %890 = vmax.xlane.f32.xlu0 %v889
    %v891 = vpop.xlane.xlu0 %890
    %v892 = vsel %vm262, %v888, -inf
    %893 = vmax.xlane.f32.xlu0 %v892
    %v894 = vpop.xlane.xlu0 %893
    %v895 = vsub.f32 %v887, %v891
    %v896 = vsub.f32 %v888, %v894
    %v897 = vmul.f32 %v895, 1.442695
    %v898 = vpow.pop %v897
    %v899 = vmul.f32 %v896, 1.442695
    %v900 = vpow.pop %v899
    %v901 = vsel %vm262, %v898, 0.0
    %902 = vadd.xlane.f32.xlu0 %v901
    %v903 = vpop.xlane.xlu0 %902
    %v904 = vsel %vm262, %v900, 0.0
    %905 = vadd.xlane.f32.xlu0 %v904
    %v906 = vpop.xlane.xlu0 %905
    %v907 = vmax.f32 %v903, 1e-20
    %v908 = vmax.f32 %v906, 1e-20
    %v909 = vrcp.pop %v907
    %v910 = vrcp.pop %v908
    %v911 = vmul.f32 %v898, %v909
    %v912 = vmul.f32 %v900, %v910
    %v913 = vpack.c.bf16 %v911, %v911
    %v914 = vpack.c.bf16 %v912, %v912
    %915 = vrot.lane.b32.xlu0 %v785, 64
    %v916 = vpop.permute.xlu0 %915
    %v918 = vsel %vm262, %v913, 0
    %v921 = vsel %vm294, %v916, 0
    %923 = vmatprep.subr.bf16.mxu0 0
    %924 = vmatpush1.bf16.msra.mxu0 %v921
    %925 = vmatprep.subr.bf16.mxu0 0
    %926 = vmatpush1.bf16.msra.mxu0 0
    %927 = vmatprep.subr.bf16.mxu0 0
    %928 = vmatpush1.bf16.msra.mxu0 0
    %929 = vmatprep.subr.bf16.mxu0 0
    %930 = vmatpush1.bf16.msra.mxu0 0
    %931 = vmatprep.subr.bf16.mxu0 0
    %932 = vmatpush1.bf16.msra.mxu0 0
    %933 = vmatprep.subr.bf16.mxu0 0
    %934 = vmatpush1.bf16.msra.mxu0 0
    %935 = vmatprep.subr.bf16.mxu0 0
    %936 = vmatpush1.bf16.msra.mxu0 0
    %937 = vmatprep.subr.bf16.mxu0 0
    %938 = vmatpush1.bf16.msra.mxu0 0
    %939 = vmatprep.subr.bf16.mxu0 0
    %940 = vmatpush1.bf16.msra.mxu0 0
    %941 = vmatprep.subr.bf16.mxu0 0
    %942 = vmatpush1.bf16.msra.mxu0 0
    %943 = vmatprep.subr.bf16.mxu0 0
    %944 = vmatpush1.bf16.msra.mxu0 0
    %945 = vmatprep.subr.bf16.mxu0 0
    %946 = vmatpush1.bf16.msra.mxu0 0
    %947 = vmatprep.subr.bf16.mxu0 0
    %948 = vmatpush1.bf16.msra.mxu0 0
    %949 = vmatprep.subr.bf16.mxu0 0
    %950 = vmatpush1.bf16.msra.mxu0 0
    %951 = vmatprep.subr.bf16.mxu0 0
    %952 = vmatpush1.bf16.msra.mxu0 0
    %953 = vmatprep.subr.bf16.mxu0 0
    %954 = vmatpush1.bf16.msra.mxu0 0
    %955 = vmatprep.mubr.bf16.mxu0 0
    %956 = vmatmul.mubr.bf16.gmra.mrb[0].mxu0 %v918
    %v957 = vpop.f32.mrb[0].mxu0
    %v958 = vadd.f32 0.0, %v957
    %v959 = vpop.f32.mrb[0].mxu0
    %v960 = vpop.f32.mrb[0].mxu0
    %v961 = vpop.f32.mrb[0].mxu0
    %962 = vdwg.mxu0
    %963 = vrot.lane.b32.xlu0 %v786, 64
    %v964 = vpop.permute.xlu0 %963
    %v966 = vsel %vm262, %v914, 0
    %v969 = vsel %vm294, %v964, 0
    %971 = vmatprep.subr.bf16.mxu0 0
    %972 = vmatpush1.bf16.msra.mxu0 %v969
    %973 = vmatprep.subr.bf16.mxu0 0
    %974 = vmatpush1.bf16.msra.mxu0 0
    %975 = vmatprep.subr.bf16.mxu0 0
    %976 = vmatpush1.bf16.msra.mxu0 0
    %977 = vmatprep.subr.bf16.mxu0 0
    %978 = vmatpush1.bf16.msra.mxu0 0
    %979 = vmatprep.subr.bf16.mxu0 0
    %980 = vmatpush1.bf16.msra.mxu0 0
    %981 = vmatprep.subr.bf16.mxu0 0
    %982 = vmatpush1.bf16.msra.mxu0 0
    %983 = vmatprep.subr.bf16.mxu0 0
    %984 = vmatpush1.bf16.msra.mxu0 0
    %985 = vmatprep.subr.bf16.mxu0 0
    %986 = vmatpush1.bf16.msra.mxu0 0
    %987 = vmatprep.subr.bf16.mxu0 0
    %988 = vmatpush1.bf16.msra.mxu0 0
    %989 = vmatprep.subr.bf16.mxu0 0
    %990 = vmatpush1.bf16.msra.mxu0 0
    %991 = vmatprep.subr.bf16.mxu0 0
    %992 = vmatpush1.bf16.msra.mxu0 0
    %993 = vmatprep.subr.bf16.mxu0 0
    %994 = vmatpush1.bf16.msra.mxu0 0
    %995 = vmatprep.subr.bf16.mxu0 0
    %996 = vmatpush1.bf16.msra.mxu0 0
    %997 = vmatprep.subr.bf16.mxu0 0
    %998 = vmatpush1.bf16.msra.mxu0 0
    %999 = vmatprep.subr.bf16.mxu0 0
    %1000 = vmatpush1.bf16.msra.mxu0 0
    %1001 = vmatprep.subr.bf16.mxu0 0
    %1002 = vmatpush1.bf16.msra.mxu0 0
    %1003 = vmatprep.mubr.bf16.mxu0 0
    %1004 = vmatmul.mubr.bf16.gmra.mrb[0].mxu0 %v966
    %v1005 = vpop.f32.mrb[0].mxu0
    %v1006 = vadd.f32 0.0, %v1005
    %v1007 = vpop.f32.mrb[0].mxu0
    %v1008 = vpop.f32.mrb[0].mxu0
    %v1009 = vpop.f32.mrb[0].mxu0
    %1010 = vdwg.mxu0
    %v1011 = vpack.c.bf16 %v1006, %v958
    %1012 = vrot.lane.b32.xlu0 %v737, 32
    %v1013 = vpop.permute.xlu0 %1012
    %1014 = vrot.lane.b32.xlu0 %v738, 32
    %v1015 = vpop.permute.xlu0 %1014
    %1019 = vrot.lane.b32.xlu0 %v728, 32
    %v1020 = vpop.permute.xlu0 %1019
    %v1023 = vsel %vm101, %v1011, 0
    %1025 = vmatprep.subr.bf16.mxu0 0
    %1026 = vmatpush1.bf16.msra.mxu0 %v1013
    %1027 = vmatprep.subr.bf16.mxu0 0
    %1028 = vmatpush1.bf16.msra.mxu0 %v1015
    %1029 = vmatprep.subr.bf16.mxu0 0
    %1030 = vmatpush1.bf16.msra.mxu0 0
    %1031 = vmatprep.subr.bf16.mxu0 0
    %1032 = vmatpush1.bf16.msra.mxu0 0
    %1033 = vmatprep.subr.bf16.mxu0 0
    %1034 = vmatpush1.bf16.msra.mxu0 0
    %1035 = vmatprep.subr.bf16.mxu0 0
    %1036 = vmatpush1.bf16.msra.mxu0 0
    %1037 = vmatprep.subr.bf16.mxu0 0
    %1038 = vmatpush1.bf16.msra.mxu0 0
    %1039 = vmatprep.subr.bf16.mxu0 0
    %1040 = vmatpush1.bf16.msra.mxu0 0
    %1041 = vmatprep.subr.bf16.mxu0 0
    %1042 = vmatpush1.bf16.msra.mxu0 0
    %1043 = vmatprep.subr.bf16.mxu0 0
    %1044 = vmatpush1.bf16.msra.mxu0 0
    %1045 = vmatprep.subr.bf16.mxu0 0
    %1046 = vmatpush1.bf16.msra.mxu0 0
    %1047 = vmatprep.subr.bf16.mxu0 0
    %1048 = vmatpush1.bf16.msra.mxu0 0
    %1049 = vmatprep.subr.bf16.mxu0 0
    %1050 = vmatpush1.bf16.msra.mxu0 0
    %1051 = vmatprep.subr.bf16.mxu0 0
    %1052 = vmatpush1.bf16.msra.mxu0 0
    %1053 = vmatprep.subr.bf16.mxu0 0
    %1054 = vmatpush1.bf16.msra.mxu0 0
    %1055 = vmatprep.subr.bf16.mxu0 0
    %1056 = vmatpush1.bf16.msra.mxu0 0
    %1057 = vmatprep.mubr.bf16.mxu0 0
    %1058 = vmatmul.mubr.bf16.gmra.mrb[0].mxu0 %v1023
    %v1059 = vpop.f32.mrb[0].mxu0
    %v1060 = vadd.f32 %v1020, %v1059
    %v1061 = vpop.f32.mrb[0].mxu0
    %v1062 = vpop.f32.mrb[0].mxu0
    %v1063 = vadd.f32 %v1020, %v1062
    %v1064 = vpop.f32.mrb[0].mxu0
    %1065 = vdwg.mxu0
    %v1066 = vadd.f32 %v43, %v1060
    %v1067 = vadd.f32 %v44, %v1063
    %v1068 = vsel %vm101, %v1066, 0.0
    %1069 = vadd.xlane.f32.xlu0 %v1068
    %v1070 = vpop.xlane.xlu0 %1069
    %v1071 = vsel %vm101, %v1067, 0.0
    %1072 = vadd.xlane.f32.xlu0 %v1071
    %v1073 = vpop.xlane.xlu0 %1072
    %v1074 = vmul.f32 %v1070, %v449
    %v1075 = vmul.f32 %v1073, %v449
    %v1076 = vsub.f32 %v1066, %v1074
    %v1077 = vsub.f32 %v1067, %v1075
    %v1078 = vmul.f32 %v1076, %v1076
    %v1079 = vmul.f32 %v1077, %v1077
    %v1080 = vsel %vm101, %v1078, 0.0
    %1081 = vadd.xlane.f32.xlu0 %v1080
    %v1082 = vpop.xlane.xlu0 %1081
    %v1083 = vsel %vm101, %v1079, 0.0
    %1084 = vadd.xlane.f32.xlu0 %v1083
    %v1085 = vpop.xlane.xlu0 %1084
    %v1086 = vmul.f32 %v1082, %v449
    %v1087 = vmul.f32 %v1085, %v449
    %v1088 = vadd.f32 %v1086, 1e-05
    %v1089 = vadd.f32 %v1087, 1e-05
    %v1090 = vrsqrt.pop %v1088
    %v1091 = vrsqrt.pop %v1089
    %v1092 = vmul.f32 %v1076, %v1090
    %v1093 = vmul.f32 %v1077, %v1091
    %v1094 = vlaneseq
    %v1095 = vshrl.u32 %v1094, 7
    %v1096 = vsub.s32 0, %v1095
    %v1097 = vrot.slane %v723, %v1096
    %v1098 = vmul.f32 %v1092, %v1097
    %v1099 = vmul.f32 %v1093, %v1097
    %1101 = vrot.lane.b32.xlu0 %v1097, 96
    %v1102 = vpop.permute.xlu0 %1101
    %v1104 = vadd.f32 %v1098, %v1102
    %v1105 = vadd.f32 %v1099, %v1102
    %s1106 = scalar_lea.vmem %s5, 32
    %v1107 = vld [vmem:[%s1106] sm:$0xf]
    %v1108 = vld [vmem:[%s1106 + $0x4] sm:$0xf]
    %v1109 = vld [vmem:[%s1106 + $0x8] sm:$0xf]
    %v1110 = vld [vmem:[%s1106 + $0xc] sm:$0xf]
    %v1111 = vld [vmem:[%s9 + $0x2] sm:$0x1]
    %v1112 = vld [vmem:[%s9 + $0x5] sm:$0x1]
    %v1113 = vpack.c.bf16 %v1105, %v1104
    %v1114 = vpack.c.bf16 %v687, %v686
    %v1115 = vlaneseq
    %v1116 = vshrl.u32 %v1115, 7
    %v1117 = vsub.s32 0, %v1116
    %v1118 = vrot.slane %v1111, %v1117
    %v1123 = vunpack.c.l.b16 %v1107
    %v1124 = vunpack.c.l.b16 %v1108
    %v1125 = vunpack.c.l.b16 %v1109
    %v1126 = vunpack.c.l.b16 %v1110
    %v1127 = vpack.c.b16 %v1124, %v1123
    %v1128 = vpack.c.b16 %v1126, %v1125
    %v1132 = vsel %vm101, %v1113, 0
    %1134 = vmatprep.subr.bf16.mxu0 0
    %1135 = vmatpush1.bf16.msra.mxu0 %v1127
    %1136 = vmatprep.subr.bf16.mxu0 0
    %1137 = vmatpush1.bf16.msra.mxu0 %v1128
    %1138 = vmatprep.subr.bf16.mxu0 0
    %1139 = vmatpush1.bf16.msra.mxu0 0
    %1140 = vmatprep.subr.bf16.mxu0 0
    %1141 = vmatpush1.bf16.msra.mxu0 0
    %1142 = vmatprep.subr.bf16.mxu0 0
    %1143 = vmatpush1.bf16.msra.mxu0 0
    %1144 = vmatprep.subr.bf16.mxu0 0
    %1145 = vmatpush1.bf16.msra.mxu0 0
    %1146 = vmatprep.subr.bf16.mxu0 0
    %1147 = vmatpush1.bf16.msra.mxu0 0
    %1148 = vmatprep.subr.bf16.mxu0 0
    %1149 = vmatpush1.bf16.msra.mxu0 0
    %1150 = vmatprep.subr.bf16.mxu0 0
    %1151 = vmatpush1.bf16.msra.mxu0 0
    %1152 = vmatprep.subr.bf16.mxu0 0
    %1153 = vmatpush1.bf16.msra.mxu0 0
    %1154 = vmatprep.subr.bf16.mxu0 0
    %1155 = vmatpush1.bf16.msra.mxu0 0
    %1156 = vmatprep.subr.bf16.mxu0 0
    %1157 = vmatpush1.bf16.msra.mxu0 0
    %1158 = vmatprep.subr.bf16.mxu0 0
    %1159 = vmatpush1.bf16.msra.mxu0 0
    %1160 = vmatprep.subr.bf16.mxu0 0
    %1161 = vmatpush1.bf16.msra.mxu0 0
    %1162 = vmatprep.subr.bf16.mxu0 0
    %1163 = vmatpush1.bf16.msra.mxu0 0
    %1164 = vmatprep.subr.bf16.mxu0 0
    %1165 = vmatpush1.bf16.msra.mxu0 0
    %1166 = vmatprep.mubr.bf16.mxu0 0
    %1167 = vmatmul.mubr.bf16.gmra.mrb[0].mxu0 %v1132
    %v1168 = vpop.f32.mrb[0].mxu0
    %v1169 = vadd.f32 %v1118, %v1168
    %v1170 = vpop.f32.mrb[0].mxu0
    %v1171 = vpop.f32.mrb[0].mxu0
    %v1172 = vadd.f32 %v1118, %v1171
    %v1173 = vpop.f32.mrb[0].mxu0
    %1174 = vdwg.mxu0
    %1175 = vrot.lane.b32.xlu0 %v1127, 96
    %v1176 = vpop.permute.xlu0 %1175
    %1177 = vrot.lane.b32.xlu0 %v1128, 96
    %v1178 = vpop.permute.xlu0 %1177
    %1182 = vrot.lane.b32.xlu0 %v1118, 96
    %v1183 = vpop.permute.xlu0 %1182
    %v1186 = vsel %vm101, %v1114, 0
    %1188 = vmatprep.subr.bf16.mxu0 0
    %1189 = vmatpush1.bf16.msra.mxu0 %v1176
    %1190 = vmatprep.subr.bf16.mxu0 0
    %1191 = vmatpush1.bf16.msra.mxu0 %v1178
    %1192 = vmatprep.subr.bf16.mxu0 0
    %1193 = vmatpush1.bf16.msra.mxu0 0
    %1194 = vmatprep.subr.bf16.mxu0 0
    %1195 = vmatpush1.bf16.msra.mxu0 0
    %1196 = vmatprep.subr.bf16.mxu0 0
    %1197 = vmatpush1.bf16.msra.mxu0 0
    %1198 = vmatprep.subr.bf16.mxu0 0
    %1199 = vmatpush1.bf16.msra.mxu0 0
    %1200 = vmatprep.subr.bf16.mxu0 0
    %1201 = vmatpush1.bf16.msra.mxu0 0
    %1202 = vmatprep.subr.bf16.mxu0 0
    %1203 = vmatpush1.bf16.msra.mxu0 0
    %1204 = vmatprep.subr.bf16.mxu0 0
    %1205 = vmatpush1.bf16.msra.mxu0 0
    %1206 = vmatprep.subr.bf16.mxu0 0
    %1207 = vmatpush1.bf16.msra.mxu0 0
    %1208 = vmatprep.subr.bf16.mxu0 0
    %1209 = vmatpush1.bf16.msra.mxu0 0
    %1210 = vmatprep.subr.bf16.mxu0 0
    %1211 = vmatpush1.bf16.msra.mxu0 0
    %1212 = vmatprep.subr.bf16.mxu0 0
    %1213 = vmatpush1.bf16.msra.mxu0 0
    %1214 = vmatprep.subr.bf16.mxu0 0
    %1215 = vmatpush1.bf16.msra.mxu0 0
    %1216 = vmatprep.subr.bf16.mxu0 0
    %1217 = vmatpush1.bf16.msra.mxu0 0
    %1218 = vmatprep.subr.bf16.mxu0 0
    %1219 = vmatpush1.bf16.msra.mxu0 0
    %1220 = vmatprep.mubr.bf16.mxu0 0
    %1221 = vmatmul.mubr.bf16.gmra.mrb[0].mxu0 %v1186
    %v1222 = vpop.f32.mrb[0].mxu0
    %v1223 = vadd.f32 %v1183, %v1222
    %v1224 = vpop.f32.mrb[0].mxu0
    %v1225 = vpop.f32.mrb[0].mxu0
    %v1226 = vadd.f32 %v1183, %v1225
    %v1227 = vpop.f32.mrb[0].mxu0
    %1228 = vdwg.mxu0
    %v1229 = vpack.c.bf16 %v1169, %v1169
    %v1230 = vpack.c.bf16 %v1172, %v1172
    %v1231 = vpack.c.bf16 %v1223, %v1223
    %v1232 = vpack.c.bf16 %v1226, %v1226
    %v1234 = vsel %vm101, %v1229, 0
    %v1237 = vsel %vm101, %v1231, 0
    %1239 = vmatprep.subr.bf16.mxu0 0
    %1240 = vmatpush1.bf16.xpose.msra.mxu0 %v1237
    %1241 = vmatprep.subr.bf16.mxu0 0
    %1242 = vmatpush1.bf16.xpose.msra.mxu0 0
    %1243 = vmatprep.subr.bf16.mxu0 0
    %1244 = vmatpush1.bf16.xpose.msra.mxu0 0
    %1245 = vmatprep.subr.bf16.mxu0 0
    %1246 = vmatpush1.bf16.xpose.msra.mxu0 0
    %1247 = vmatprep.subr.bf16.mxu0 0
    %1248 = vmatpush1.bf16.xpose.msra.mxu0 0
    %1249 = vmatprep.subr.bf16.mxu0 0
    %1250 = vmatpush1.bf16.xpose.msra.mxu0 0
    %1251 = vmatprep.subr.bf16.mxu0 0
    %1252 = vmatpush1.bf16.xpose.msra.mxu0 0
    %1253 = vmatprep.subr.bf16.mxu0 0
    %1254 = vmatpush1.bf16.xpose.msra.mxu0 0
    %1255 = vmatprep.subr.bf16.mxu0 0
    %1256 = vmatpush1.bf16.xpose.msra.mxu0 0
    %1257 = vmatprep.subr.bf16.mxu0 0
    %1258 = vmatpush1.bf16.xpose.msra.mxu0 0
    %1259 = vmatprep.subr.bf16.mxu0 0
    %1260 = vmatpush1.bf16.xpose.msra.mxu0 0
    %1261 = vmatprep.subr.bf16.mxu0 0
    %1262 = vmatpush1.bf16.xpose.msra.mxu0 0
    %1263 = vmatprep.subr.bf16.mxu0 0
    %1264 = vmatpush1.bf16.xpose.msra.mxu0 0
    %1265 = vmatprep.subr.bf16.mxu0 0
    %1266 = vmatpush1.bf16.xpose.msra.mxu0 0
    %1267 = vmatprep.subr.bf16.mxu0 0
    %1268 = vmatpush1.bf16.xpose.msra.mxu0 0
    %1269 = vmatprep.subr.bf16.mxu0 0
    %1270 = vmatpush1.bf16.xpose.msra.mxu0 0
    %1271 = vmatprep.mubr.bf16.mxu0 0
    %1272 = vmatmul.mubr.bf16.gmra.mrb[0].mxu0 %v1234
    %v1273 = vpop.f32.mrb[0].mxu0
    %v1274 = vadd.f32 0.0, %v1273
    %v1275 = vpop.f32.mrb[0].mxu0
    %v1276 = vpop.f32.mrb[0].mxu0
    %v1277 = vpop.f32.mrb[0].mxu0
    %1278 = vdwg.mxu0
    %v1280 = vsel %vm101, %v1230, 0
    %v1283 = vsel %vm101, %v1232, 0
    %1285 = vmatprep.subr.bf16.mxu0 0
    %1286 = vmatpush1.bf16.xpose.msra.mxu0 %v1283
    %1287 = vmatprep.subr.bf16.mxu0 0
    %1288 = vmatpush1.bf16.xpose.msra.mxu0 0
    %1289 = vmatprep.subr.bf16.mxu0 0
    %1290 = vmatpush1.bf16.xpose.msra.mxu0 0
    %1291 = vmatprep.subr.bf16.mxu0 0
    %1292 = vmatpush1.bf16.xpose.msra.mxu0 0
    %1293 = vmatprep.subr.bf16.mxu0 0
    %1294 = vmatpush1.bf16.xpose.msra.mxu0 0
    %1295 = vmatprep.subr.bf16.mxu0 0
    %1296 = vmatpush1.bf16.xpose.msra.mxu0 0
    %1297 = vmatprep.subr.bf16.mxu0 0
    %1298 = vmatpush1.bf16.xpose.msra.mxu0 0
    %1299 = vmatprep.subr.bf16.mxu0 0
    %1300 = vmatpush1.bf16.xpose.msra.mxu0 0
    %1301 = vmatprep.subr.bf16.mxu0 0
    %1302 = vmatpush1.bf16.xpose.msra.mxu0 0
    %1303 = vmatprep.subr.bf16.mxu0 0
    %1304 = vmatpush1.bf16.xpose.msra.mxu0 0
    %1305 = vmatprep.subr.bf16.mxu0 0
    %1306 = vmatpush1.bf16.xpose.msra.mxu0 0
    %1307 = vmatprep.subr.bf16.mxu0 0
    %1308 = vmatpush1.bf16.xpose.msra.mxu0 0
    %1309 = vmatprep.subr.bf16.mxu0 0
    %1310 = vmatpush1.bf16.xpose.msra.mxu0 0
    %1311 = vmatprep.subr.bf16.mxu0 0
    %1312 = vmatpush1.bf16.xpose.msra.mxu0 0
    %1313 = vmatprep.subr.bf16.mxu0 0
    %1314 = vmatpush1.bf16.xpose.msra.mxu0 0
    %1315 = vmatprep.subr.bf16.mxu0 0
    %1316 = vmatpush1.bf16.xpose.msra.mxu0 0
    %1317 = vmatprep.mubr.bf16.mxu0 0
    %1318 = vmatmul.mubr.bf16.gmra.mrb[0].mxu0 %v1280
    %v1319 = vpop.f32.mrb[0].mxu0
    %v1320 = vadd.f32 0.0, %v1319
    %v1321 = vpop.f32.mrb[0].mxu0
    %v1322 = vpop.f32.mrb[0].mxu0
    %v1323 = vpop.f32.mrb[0].mxu0
    %1324 = vdwg.mxu0
    %v1325 = vmul.f32 %v1274, 0.17677669
    %v1326 = vmul.f32 %v1320, 0.17677669
    %v1327 = vadd.f32 %v1325, %v253
    %v1328 = vadd.f32 %v1326, %v257
    %v1329 = vsel %vm262, %v1327, -inf
    %1330 = vmax.xlane.f32.xlu0 %v1329
    %v1331 = vpop.xlane.xlu0 %1330
    %v1332 = vsel %vm262, %v1328, -inf
    %1333 = vmax.xlane.f32.xlu0 %v1332
    %v1334 = vpop.xlane.xlu0 %1333
    %v1335 = vsub.f32 %v1327, %v1331
    %v1336 = vsub.f32 %v1328, %v1334
    %v1337 = vmul.f32 %v1335, 1.442695
    %v1338 = vpow.pop %v1337
    %v1339 = vmul.f32 %v1336, 1.442695
    %v1340 = vpow.pop %v1339
    %v1341 = vsel %vm262, %v1338, 0.0
    %1342 = vadd.xlane.f32.xlu0 %v1341
    %v1343 = vpop.xlane.xlu0 %1342
    %v1344 = vsel %vm262, %v1340, 0.0
    %1345 = vadd.xlane.f32.xlu0 %v1344
    %v1346 = vpop.xlane.xlu0 %1345
    %v1347 = vmax.f32 %v1343, 1e-20
    %v1348 = vmax.f32 %v1346, 1e-20
    %v1349 = vrcp.pop %v1347
    %v1350 = vrcp.pop %v1348
    %v1351 = vmul.f32 %v1338, %v1349
    %v1352 = vmul.f32 %v1340, %v1350
    %v1353 = vpack.c.bf16 %v1351, %v1351
    %v1354 = vpack.c.bf16 %v1352, %v1352
    %1356 = vrot.lane.b32.xlu0 %v1231, 96
    %v1357 = vpop.permute.xlu0 %1356
    %v1359 = vsel %vm262, %v1353, 0
    %v1362 = vsel %vm294, %v1357, 0
    %1364 = vmatprep.subr.bf16.mxu0 0
    %1365 = vmatpush1.bf16.msra.mxu0 %v1362
    %1366 = vmatprep.subr.bf16.mxu0 0
    %1367 = vmatpush1.bf16.msra.mxu0 0
    %1368 = vmatprep.subr.bf16.mxu0 0
    %1369 = vmatpush1.bf16.msra.mxu0 0
    %1370 = vmatprep.subr.bf16.mxu0 0
    %1371 = vmatpush1.bf16.msra.mxu0 0
    %1372 = vmatprep.subr.bf16.mxu0 0
    %1373 = vmatpush1.bf16.msra.mxu0 0
    %1374 = vmatprep.subr.bf16.mxu0 0
    %1375 = vmatpush1.bf16.msra.mxu0 0
    %1376 = vmatprep.subr.bf16.mxu0 0
    %1377 = vmatpush1.bf16.msra.mxu0 0
    %1378 = vmatprep.subr.bf16.mxu0 0
    %1379 = vmatpush1.bf16.msra.mxu0 0
    %1380 = vmatprep.subr.bf16.mxu0 0
    %1381 = vmatpush1.bf16.msra.mxu0 0
    %1382 = vmatprep.subr.bf16.mxu0 0
    %1383 = vmatpush1.bf16.msra.mxu0 0
    %1384 = vmatprep.subr.bf16.mxu0 0
    %1385 = vmatpush1.bf16.msra.mxu0 0
    %1386 = vmatprep.subr.bf16.mxu0 0
    %1387 = vmatpush1.bf16.msra.mxu0 0
    %1388 = vmatprep.subr.bf16.mxu0 0
    %1389 = vmatpush1.bf16.msra.mxu0 0
    %1390 = vmatprep.subr.bf16.mxu0 0
    %1391 = vmatpush1.bf16.msra.mxu0 0
    %1392 = vmatprep.subr.bf16.mxu0 0
    %1393 = vmatpush1.bf16.msra.mxu0 0
    %1394 = vmatprep.subr.bf16.mxu0 0
    %1395 = vmatpush1.bf16.msra.mxu0 0
    %1396 = vmatprep.mubr.bf16.mxu0 0
    %1397 = vmatmul.mubr.bf16.gmra.mrb[0].mxu0 %v1359
    %v1398 = vpop.f32.mrb[0].mxu0
    %v1399 = vadd.f32 0.0, %v1398
    %v1400 = vpop.f32.mrb[0].mxu0
    %v1401 = vpop.f32.mrb[0].mxu0
    %v1402 = vpop.f32.mrb[0].mxu0
    %1403 = vdwg.mxu0
    %1405 = vrot.lane.b32.xlu0 %v1232, 96
    %v1406 = vpop.permute.xlu0 %1405
    %v1408 = vsel %vm262, %v1354, 0
    %v1411 = vsel %vm294, %v1406, 0
    %1413 = vmatprep.subr.bf16.mxu0 0
    %1414 = vmatpush1.bf16.msra.mxu0 %v1411
    %1415 = vmatprep.subr.bf16.mxu0 0
    %1416 = vmatpush1.bf16.msra.mxu0 0
    %1417 = vmatprep.subr.bf16.mxu0 0
    %1418 = vmatpush1.bf16.msra.mxu0 0
    %1419 = vmatprep.subr.bf16.mxu0 0
    %1420 = vmatpush1.bf16.msra.mxu0 0
    %1421 = vmatprep.subr.bf16.mxu0 0
    %1422 = vmatpush1.bf16.msra.mxu0 0
    %1423 = vmatprep.subr.bf16.mxu0 0
    %1424 = vmatpush1.bf16.msra.mxu0 0
    %1425 = vmatprep.subr.bf16.mxu0 0
    %1426 = vmatpush1.bf16.msra.mxu0 0
    %1427 = vmatprep.subr.bf16.mxu0 0
    %1428 = vmatpush1.bf16.msra.mxu0 0
    %1429 = vmatprep.subr.bf16.mxu0 0
    %1430 = vmatpush1.bf16.msra.mxu0 0
    %1431 = vmatprep.subr.bf16.mxu0 0
    %1432 = vmatpush1.bf16.msra.mxu0 0
    %1433 = vmatprep.subr.bf16.mxu0 0
    %1434 = vmatpush1.bf16.msra.mxu0 0
    %1435 = vmatprep.subr.bf16.mxu0 0
    %1436 = vmatpush1.bf16.msra.mxu0 0
    %1437 = vmatprep.subr.bf16.mxu0 0
    %1438 = vmatpush1.bf16.msra.mxu0 0
    %1439 = vmatprep.subr.bf16.mxu0 0
    %1440 = vmatpush1.bf16.msra.mxu0 0
    %1441 = vmatprep.subr.bf16.mxu0 0
    %1442 = vmatpush1.bf16.msra.mxu0 0
    %1443 = vmatprep.subr.bf16.mxu0 0
    %1444 = vmatpush1.bf16.msra.mxu0 0
    %1445 = vmatprep.mubr.bf16.mxu0 0
    %1446 = vmatmul.mubr.bf16.gmra.mrb[0].mxu0 %v1408
    %v1447 = vpop.f32.mrb[0].mxu0
    %v1448 = vadd.f32 0.0, %v1447
    %v1449 = vpop.f32.mrb[0].mxu0
    %v1450 = vpop.f32.mrb[0].mxu0
    %v1451 = vpop.f32.mrb[0].mxu0
    %1452 = vdwg.mxu0
    %v1453 = vpack.c.bf16 %v1448, %v1399
    %1454 = vrot.lane.b32.xlu0 %v1127, 32
    %v1455 = vpop.permute.xlu0 %1454
    %1456 = vrot.lane.b32.xlu0 %v1128, 32
    %v1457 = vpop.permute.xlu0 %1456
    %1460 = vrot.lane.b32.xlu0 %v1118, 32
    %v1461 = vpop.permute.xlu0 %1460
    %v1464 = vsel %vm101, %v1453, 0
    %1466 = vmatprep.subr.bf16.mxu0 0
    %1467 = vmatpush1.bf16.msra.mxu0 %v1455
    %1468 = vmatprep.subr.bf16.mxu0 0
    %1469 = vmatpush1.bf16.msra.mxu0 %v1457
    %1470 = vmatprep.subr.bf16.mxu0 0
    %1471 = vmatpush1.bf16.msra.mxu0 0
    %1472 = vmatprep.subr.bf16.mxu0 0
    %1473 = vmatpush1.bf16.msra.mxu0 0
    %1474 = vmatprep.subr.bf16.mxu0 0
    %1475 = vmatpush1.bf16.msra.mxu0 0
    %1476 = vmatprep.subr.bf16.mxu0 0
    %1477 = vmatpush1.bf16.msra.mxu0 0
    %1478 = vmatprep.subr.bf16.mxu0 0
    %1479 = vmatpush1.bf16.msra.mxu0 0
    %1480 = vmatprep.subr.bf16.mxu0 0
    %1481 = vmatpush1.bf16.msra.mxu0 0
    %1482 = vmatprep.subr.bf16.mxu0 0
    %1483 = vmatpush1.bf16.msra.mxu0 0
    %1484 = vmatprep.subr.bf16.mxu0 0
    %1485 = vmatpush1.bf16.msra.mxu0 0
    %1486 = vmatprep.subr.bf16.mxu0 0
    %1487 = vmatpush1.bf16.msra.mxu0 0
    %1488 = vmatprep.subr.bf16.mxu0 0
    %1489 = vmatpush1.bf16.msra.mxu0 0
    %1490 = vmatprep.subr.bf16.mxu0 0
    %1491 = vmatpush1.bf16.msra.mxu0 0
    %1492 = vmatprep.subr.bf16.mxu0 0
    %1493 = vmatpush1.bf16.msra.mxu0 0
    %1494 = vmatprep.subr.bf16.mxu0 0
    %1495 = vmatpush1.bf16.msra.mxu0 0
    %1496 = vmatprep.subr.bf16.mxu0 0
    %1497 = vmatpush1.bf16.msra.mxu0 0
    %1498 = vmatprep.mubr.bf16.mxu0 0
    %1499 = vmatmul.mubr.bf16.gmra.mrb[0].mxu0 %v1464
    %v1500 = vpop.f32.mrb[0].mxu0
    %v1501 = vadd.f32 %v1461, %v1500
    %v1502 = vpop.f32.mrb[0].mxu0
    %v1503 = vpop.f32.mrb[0].mxu0
    %v1504 = vadd.f32 %v1461, %v1503
    %v1505 = vpop.f32.mrb[0].mxu0
    %1506 = vdwg.mxu0
    %v1507 = vadd.f32 %v1104, %v1501
    %v1508 = vadd.f32 %v1105, %v1504
    %v1509 = vsel %vm101, %v1507, 0.0
    %1510 = vadd.xlane.f32.xlu0 %v1509
    %v1511 = vpop.xlane.xlu0 %1510
    %v1512 = vsel %vm101, %v1508, 0.0
    %1513 = vadd.xlane.f32.xlu0 %v1512
    %v1514 = vpop.xlane.xlu0 %1513
    %v1515 = vmul.f32 %v1511, %v449
    %v1516 = vmul.f32 %v1514, %v449
    %v1517 = vsub.f32 %v1507, %v1515
    %v1518 = vsub.f32 %v1508, %v1516
    %v1519 = vmul.f32 %v1517, %v1517
    %v1520 = vmul.f32 %v1518, %v1518
    %v1521 = vsel %vm101, %v1519, 0.0
    %1522 = vadd.xlane.f32.xlu0 %v1521
    %v1523 = vpop.xlane.xlu0 %1522
    %v1524 = vsel %vm101, %v1520, 0.0
    %1525 = vadd.xlane.f32.xlu0 %v1524
    %v1526 = vpop.xlane.xlu0 %1525
    %v1527 = vmul.f32 %v1523, %v449
    %v1528 = vmul.f32 %v1526, %v449
    %v1529 = vadd.f32 %v1527, 1e-05
    %v1530 = vadd.f32 %v1528, 1e-05
    %v1531 = vrsqrt.pop %v1529
    %v1532 = vrsqrt.pop %v1530
    %v1533 = vmul.f32 %v1517, %v1531
    %v1534 = vmul.f32 %v1518, %v1532
    %v1535 = vlaneseq
    %v1536 = vshrl.u32 %v1535, 7
    %v1537 = vsub.s32 0, %v1536
    %v1538 = vrot.slane %v1112, %v1537
    %v1539 = vmul.f32 %v1533, %v1538
    %v1540 = vmul.f32 %v1534, %v1538
    %1542 = vrot.lane.b32.xlu0 %v1538, 96
    %v1543 = vpop.permute.xlu0 %1542
    %v1545 = vadd.f32 %v1539, %v1543
    %v1546 = vadd.f32 %v1540, %v1543
    %s1547 = scalar_lea.vmem %s6, 16
    %v1548 = vld [vmem:[%s1547] sm:$0xf]
    %v1549 = vld [vmem:[%s1547 + $0x4] sm:$0xf]
    %v1550 = vld [vmem:[%s1547 + $0x8] sm:$0xf]
    %v1551 = vld [vmem:[%s1547 + $0xc] sm:$0xf]
    %s1552 = scalar_lea.vmem %s7, 32
    %v1553 = vld [vmem:[%s1552] sm:$0xf]
    %v1554 = vld [vmem:[%s1552 + $0x4] sm:$0xf]
    %v1555 = vld [vmem:[%s1552 + $0x8] sm:$0xf]
    %v1556 = vld [vmem:[%s1552 + $0xc] sm:$0xf]
    %v1557 = vld [vmem:[%s1552 + $0x10] sm:$0xf]
    %v1558 = vld [vmem:[%s1552 + $0x14] sm:$0xf]
    %v1559 = vld [vmem:[%s1552 + $0x18] sm:$0xf]
    %v1560 = vld [vmem:[%s1552 + $0x1c] sm:$0xf]
    %v1561 = vld [vmem:[%s9 + $0x7] sm:$0x1]
    %v1562 = vld [vmem:[%s9 + $0x9] sm:$0x1]
    %v1563 = vpack.c.bf16 %v1546, %v1545
    %v1564 = vlaneseq
    %v1565 = vshrl.u32 %v1564, 7
    %v1566 = vsub.s32 0, %v1565
    %v1567 = vrot.slane %v1561, %v1566
    %v1572 = vunpack.c.l.b16 %v1548
    %v1573 = vunpack.c.l.b16 %v1549
    %v1574 = vunpack.c.l.b16 %v1550
    %v1575 = vunpack.c.l.b16 %v1551
    %v1576 = vpack.c.b16 %v1573, %v1572
    %v1577 = vpack.c.b16 %v1575, %v1574
    %v1581 = vsel %vm101, %v1563, 0
    %1583 = vmatprep.subr.bf16.mxu0 0
    %1584 = vmatpush1.bf16.msra.mxu0 %v1576
    %1585 = vmatprep.subr.bf16.mxu0 0
    %1586 = vmatpush1.bf16.msra.mxu0 %v1577
    %1587 = vmatprep.subr.bf16.mxu0 0
    %1588 = vmatpush1.bf16.msra.mxu0 0
    %1589 = vmatprep.subr.bf16.mxu0 0
    %1590 = vmatpush1.bf16.msra.mxu0 0
    %1591 = vmatprep.subr.bf16.mxu0 0
    %1592 = vmatpush1.bf16.msra.mxu0 0
    %1593 = vmatprep.subr.bf16.mxu0 0
    %1594 = vmatpush1.bf16.msra.mxu0 0
    %1595 = vmatprep.subr.bf16.mxu0 0
    %1596 = vmatpush1.bf16.msra.mxu0 0
    %1597 = vmatprep.subr.bf16.mxu0 0
    %1598 = vmatpush1.bf16.msra.mxu0 0
    %1599 = vmatprep.subr.bf16.mxu0 0
    %1600 = vmatpush1.bf16.msra.mxu0 0
    %1601 = vmatprep.subr.bf16.mxu0 0
    %1602 = vmatpush1.bf16.msra.mxu0 0
    %1603 = vmatprep.subr.bf16.mxu0 0
    %1604 = vmatpush1.bf16.msra.mxu0 0
    %1605 = vmatprep.subr.bf16.mxu0 0
    %1606 = vmatpush1.bf16.msra.mxu0 0
    %1607 = vmatprep.subr.bf16.mxu0 0
    %1608 = vmatpush1.bf16.msra.mxu0 0
    %1609 = vmatprep.subr.bf16.mxu0 0
    %1610 = vmatpush1.bf16.msra.mxu0 0
    %1611 = vmatprep.subr.bf16.mxu0 0
    %1612 = vmatpush1.bf16.msra.mxu0 0
    %1613 = vmatprep.subr.bf16.mxu0 0
    %1614 = vmatpush1.bf16.msra.mxu0 0
    %1615 = vmatprep.mubr.bf16.mxu0 0
    %1616 = vmatmul.mubr.bf16.gmra.mrb[0].mxu0 %v1581
    %v1617 = vpop.f32.mrb[0].mxu0
    %v1618 = vadd.f32 %v1567, %v1617
    %v1619 = vpop.f32.mrb[0].mxu0
    %v1620 = vpop.f32.mrb[0].mxu0
    %v1621 = vadd.f32 %v1567, %v1620
    %v1622 = vpop.f32.mrb[0].mxu0
    %1623 = vdwg.mxu0
    %v1624 = vmul.f32 %v1618, %v1618
    %v1625 = vmul.f32 %v1621, %v1621
    %v1626 = vmul.f32 %v1618, %v1624
    %v1627 = vmul.f32 %v1621, %v1625
    %v1628 = vmul.f32 %v1626, 0.044715
    %v1629 = vmul.f32 %v1627, 0.044715
    %v1630 = vadd.f32 %v1618, %v1628
    %v1631 = vadd.f32 %v1621, %v1629
    %v1632 = vmul.f32 %v1630, 0.7978846
    %v1633 = vmul.f32 %v1631, 0.7978846
    %v1634 = vtanh.pop %v1632
    %v1635 = vtanh.pop %v1633
    %v1636 = vadd.f32 %v1634, 1.0
    %v1637 = vadd.f32 %v1635, 1.0
    %v1638 = vmul.f32 %v1636, 0.5
    %v1639 = vmul.f32 %v1637, 0.5
    %v1640 = vmul.f32 %v1618, %v1638
    %v1641 = vmul.f32 %v1621, %v1639
    %v1642 = vpack.c.bf16 %v1641, %v1640
    %v1643 = vlaneseq
    %v1644 = vshrl.u32 %v1643, 7
    %v1645 = vsub.s32 0, %v1644
    %v1646 = vrot.slane %v1562, %v1645
    %v1655 = vunpack.c.l.b16 %v1553
    %v1656 = vunpack.c.l.b16 %v1554
    %v1657 = vunpack.c.l.b16 %v1555
    %v1658 = vunpack.c.l.b16 %v1556
    %v1659 = vunpack.c.l.b16 %v1557
    %v1660 = vunpack.c.l.b16 %v1558
    %v1661 = vunpack.c.l.b16 %v1559
    %v1662 = vunpack.c.l.b16 %v1560
    %v1663 = vpack.c.b16 %v1656, %v1655
    %v1664 = vpack.c.b16 %v1658, %v1657
    %v1665 = vpack.c.b16 %v1660, %v1659
    %v1666 = vpack.c.b16 %v1662, %v1661
    %v1672 = vsel %vm604, %v1642, 0
    %1674 = vmatprep.subr.bf16.mxu0 0
    %1675 = vmatpush1.bf16.msra.mxu0 %v1663
    %1676 = vmatprep.subr.bf16.mxu0 0
    %1677 = vmatpush1.bf16.msra.mxu0 %v1664
    %1678 = vmatprep.subr.bf16.mxu0 0
    %1679 = vmatpush1.bf16.msra.mxu0 %v1665
    %1680 = vmatprep.subr.bf16.mxu0 0
    %1681 = vmatpush1.bf16.msra.mxu0 %v1666
    %1682 = vmatprep.subr.bf16.mxu0 0
    %1683 = vmatpush1.bf16.msra.mxu0 0
    %1684 = vmatprep.subr.bf16.mxu0 0
    %1685 = vmatpush1.bf16.msra.mxu0 0
    %1686 = vmatprep.subr.bf16.mxu0 0
    %1687 = vmatpush1.bf16.msra.mxu0 0
    %1688 = vmatprep.subr.bf16.mxu0 0
    %1689 = vmatpush1.bf16.msra.mxu0 0
    %1690 = vmatprep.subr.bf16.mxu0 0
    %1691 = vmatpush1.bf16.msra.mxu0 0
    %1692 = vmatprep.subr.bf16.mxu0 0
    %1693 = vmatpush1.bf16.msra.mxu0 0
    %1694 = vmatprep.subr.bf16.mxu0 0
    %1695 = vmatpush1.bf16.msra.mxu0 0
    %1696 = vmatprep.subr.bf16.mxu0 0
    %1697 = vmatpush1.bf16.msra.mxu0 0
    %1698 = vmatprep.subr.bf16.mxu0 0
    %1699 = vmatpush1.bf16.msra.mxu0 0
    %1700 = vmatprep.subr.bf16.mxu0 0
    %1701 = vmatpush1.bf16.msra.mxu0 0
    %1702 = vmatprep.subr.bf16.mxu0 0
    %1703 = vmatpush1.bf16.msra.mxu0 0
    %1704 = vmatprep.subr.bf16.mxu0 0
    %1705 = vmatpush1.bf16.msra.mxu0 0
    %1706 = vmatprep.mubr.bf16.mxu0 0
    %1707 = vmatmul.mubr.bf16.gmra.mrb[0].mxu0 %v1672
    %v1708 = vpop.f32.mrb[0].mxu0
    %v1709 = vadd.f32 %v1646, %v1708
    %v1710 = vpop.f32.mrb[0].mxu0
    %v1711 = vpop.f32.mrb[0].mxu0
    %v1712 = vadd.f32 %v1646, %v1711
    %v1713 = vpop.f32.mrb[0].mxu0
    %1714 = vdwg.mxu0
    %v1715 = vadd.f32 %v1545, %v1709
    %v1716 = vadd.f32 %v1546, %v1712
    %v1717 = vsel %vm101, %v1715, 0.0
    %1718 = vadd.xlane.f32.xlu0 %v1717
    %v1719 = vpop.xlane.xlu0 %1718
    %v1720 = vsel %vm101, %v1716, 0.0
    %1721 = vadd.xlane.f32.xlu0 %v1720
    %v1722 = vpop.xlane.xlu0 %1721
    %v1723 = vmul.f32 %v1719, %v449
    %v1724 = vmul.f32 %v1722, %v449
    %v1725 = vsub.f32 %v1715, %v1723
    %v1726 = vsub.f32 %v1716, %v1724
    %v1727 = vmul.f32 %v1725, %v1725
    %v1728 = vmul.f32 %v1726, %v1726
    %v1729 = vsel %vm101, %v1727, 0.0
    %1730 = vadd.xlane.f32.xlu0 %v1729
    %v1731 = vpop.xlane.xlu0 %1730
    %v1732 = vsel %vm101, %v1728, 0.0
    %1733 = vadd.xlane.f32.xlu0 %v1732
    %v1734 = vpop.xlane.xlu0 %1733
    %v1735 = vmul.f32 %v1731, %v449
    %v1736 = vmul.f32 %v1734, %v449
    %v1737 = vadd.f32 %v1735, 1e-05
    %v1738 = vadd.f32 %v1736, 1e-05
    %v1739 = vrsqrt.pop %v1737
    %v1740 = vrsqrt.pop %v1738
    %v1741 = vmul.f32 %v1725, %v1739
    %v1742 = vmul.f32 %v1726, %v1740
    %1744 = vrot.lane.b32.xlu0 %v1646, 96
    %v1745 = vpop.permute.xlu0 %1744
    %v1747 = vmul.f32 %v1741, %v1745
    %v1748 = vmul.f32 %v1742, %v1745
    %1749 = vrot.lane.b32.xlu0 %v1646, 64
    %v1750 = vpop.permute.xlu0 %1749
    %v1752 = vadd.f32 %v1747, %v1750
    %v1753 = vadd.f32 %v1748, %v1750
    %v1754 = vpack.c.bf16 %v1753, %v1752
    %v1755 = vld [vmem:[%s8] sm:$0xf]
    %v1756 = vld [vmem:[%s8 + $0x4] sm:$0xf]
    %v1757 = vld [vmem:[%s8 + $0x8] sm:$0xf]
    %v1758 = vld [vmem:[%s8 + $0xc] sm:$0xf]
    %v1759 = vld [vmem:[%s8 + $0x10] sm:$0xf]
    %v1760 = vld [vmem:[%s8 + $0x14] sm:$0xf]
    %v1761 = vld [vmem:[%s8 + $0x18] sm:$0xf]
    %v1762 = vld [vmem:[%s8 + $0x1c] sm:$0xf]
    %v1763 = vld [vmem:[%s9 + $0xa] sm:$0x1]
    %v1764 = vlaneseq
    %v1765 = vshrl.u32 %v1764, 7
    %v1766 = vsub.s32 0, %v1765
    %v1767 = vrot.slane %v1763, %v1766
    %v1776 = vunpack.c.l.b16 %v1755
    %v1777 = vunpack.c.l.b16 %v1756
    %v1778 = vunpack.c.l.b16 %v1757
    %v1779 = vunpack.c.l.b16 %v1758
    %v1780 = vunpack.c.l.b16 %v1759
    %v1781 = vunpack.c.l.b16 %v1760
    %v1782 = vunpack.c.l.b16 %v1761
    %v1783 = vunpack.c.l.b16 %v1762
    %v1784 = vpack.c.b16 %v1777, %v1776
    %v1785 = vpack.c.b16 %v1779, %v1778
    %v1786 = vpack.c.b16 %v1781, %v1780
    %v1787 = vpack.c.b16 %v1783, %v1782
    %v1789 = vsel %vm101, %v1754, 0
    %v1792 = vsel %vm101, %v1784, 0
    %v1795 = vsel %vm101, %v1785, 0
    %v1798 = vsel %vm101, %v1786, 0
    %v1801 = vsel %vm101, %v1787, 0
    %1803 = vmatprep.subr.bf16.mxu0 0
    %1804 = vmatpush1.bf16.xpose.msra.mxu0 %v1792
    %1805 = vmatprep.subr.bf16.mxu0 0
    %1806 = vmatpush1.bf16.xpose.msra.mxu0 %v1795
    %1807 = vmatprep.subr.bf16.mxu0 0
    %1808 = vmatpush1.bf16.xpose.msra.mxu0 %v1798
    %1809 = vmatprep.subr.bf16.mxu0 0
    %1810 = vmatpush1.bf16.xpose.msra.mxu0 %v1801
    %1811 = vmatprep.subr.bf16.mxu0 0
    %1812 = vmatpush1.bf16.xpose.msra.mxu0 0
    %1813 = vmatprep.subr.bf16.mxu0 0
    %1814 = vmatpush1.bf16.xpose.msra.mxu0 0
    %1815 = vmatprep.subr.bf16.mxu0 0
    %1816 = vmatpush1.bf16.xpose.msra.mxu0 0
    %1817 = vmatprep.subr.bf16.mxu0 0
    %1818 = vmatpush1.bf16.xpose.msra.mxu0 0
    %1819 = vmatprep.subr.bf16.mxu0 0
    %1820 = vmatpush1.bf16.xpose.msra.mxu0 0
    %1821 = vmatprep.subr.bf16.mxu0 0
    %1822 = vmatpush1.bf16.xpose.msra.mxu0 0
    %1823 = vmatprep.subr.bf16.mxu0 0
    %1824 = vmatpush1.bf16.xpose.msra.mxu0 0
    %1825 = vmatprep.subr.bf16.mxu0 0
    %1826 = vmatpush1.bf16.xpose.msra.mxu0 0
    %1827 = vmatprep.subr.bf16.mxu0 0
    %1828 = vmatpush1.bf16.xpose.msra.mxu0 0
    %1829 = vmatprep.subr.bf16.mxu0 0
    %1830 = vmatpush1.bf16.xpose.msra.mxu0 0
    %1831 = vmatprep.subr.bf16.mxu0 0
    %1832 = vmatpush1.bf16.xpose.msra.mxu0 0
    %1833 = vmatprep.subr.bf16.mxu0 0
    %1834 = vmatpush1.bf16.xpose.msra.mxu0 0
    %1835 = vmatprep.mubr.bf16.mxu0 0
    %1836 = vmatmul.mubr.bf16.gmra.mrb[0].mxu0 %v1789
    %v1837 = vpop.f32.mrb[0].mxu0
    %v1838 = vadd.f32 %v1767, %v1837
    %v1839 = vpop.f32.mrb[0].mxu0
    %v1840 = vpop.f32.mrb[0].mxu0
    %v1841 = vadd.f32 %v1767, %v1840
    %v1842 = vpop.f32.mrb[0].mxu0
    %1843 = vdwg.mxu0
    %1844 = vst.msk [vmem:[#allocation4] sm:$0xff] %vm604, %v1838
    %1845 = vst.msk [vmem:[#allocation4 + $0x8] sm:$0xff] %vm604, %v1841
    %v1846 = vld [vmem:[%s4] sm:$0xff]
    %v1847 = vld [vmem:[%s4 + $0x8] sm:$0xff]
    %vm1848 = vcmp.ne.s32.totalorder %v1846, 4294967196
    %vm1849 = vcmp.ne.s32.totalorder %v1847, 4294967196
    %v1850 = vsel %vm1848, 1, 0
    %v1851 = vsel %vm1849, 1, 0
    %v1852 = vcvt.s32.f32 %v1850
    %v1853 = vcvt.s32.f32 %v1851
    %v1854 = vsel %vm604, %v1838, -inf
    %1855 = vmax.xlane.f32.xlu0 %v1854
    %v1856 = vpop.xlane.xlu0 %1855
    %v1857 = vsel %vm604, %v1841, -inf
    %1858 = vmax.xlane.f32.xlu0 %v1857
    %v1859 = vpop.xlane.xlu0 %1858
    %v1860 = vsub.f32 %v1838, %v1856
    %v1861 = vsub.f32 %v1841, %v1859
    %v1862 = vmul.f32 %v1860, 1.442695
    %v1863 = vpow.pop %v1862
    %v1864 = vmul.f32 %v1861, 1.442695
    %v1865 = vpow.pop %v1864
    %v1866 = vsel %vm604, %v1863, 0.0
    %1867 = vadd.xlane.f32.xlu0 %v1866
    %v1868 = vpop.xlane.xlu0 %1867
    %v1869 = vsel %vm604, %v1865, 0.0
    %1870 = vadd.xlane.f32.xlu0 %v1869
    %v1871 = vpop.xlane.xlu0 %1870
    %v1872 = vlog2.pop %v1868
    %v1873 = vmul.f32 %v1872, 0.6931472
    %v1874 = vlog2.pop %v1871
    %v1875 = vmul.f32 %v1874, 0.6931472
    %v1876 = vadd.f32 %v1873, %v1856
    %v1877 = vadd.f32 %v1875, %v1859
    %1878 = vset.pattern.permute.xlu0 0
    %1879 = vperm.xlu0 %1878, %v1846
    %v1880 = vpop.permute.xlu0 %1879
    %1881 = vset.pattern.permute.xlu0 0
    %1882 = vperm.xlu0 %1881, %v1847
    %v1883 = vpop.permute.xlu0 %1882
    %vm1884 = vcmp.eq.s32.totalorder %v56, %v1880
    %vm1885 = vcmp.eq.s32.totalorder %v56, %v1883
    %v1886 = vsel %vm1884, %v1838, 0.0
    %v1887 = vsel %vm1885, %v1841, 0.0
    %v1888 = vsel %vm604, %v1886, 0.0
    %1889 = vadd.xlane.f32.xlu0 %v1888
    %v1890 = vpop.xlane.xlu0 %1889
    %v1891 = vsel %vm604, %v1887, 0.0
    %1892 = vadd.xlane.f32.xlu0 %v1891
    %v1893 = vpop.xlane.xlu0 %1892
    %v1894 = vsub.f32 %v1876, %v1890
    %v1895 = vsub.f32 %v1877, %v1893
    %v1896 = vmul.f32 %v1894, %v1852
    %v1897 = vmul.f32 %v1895, %v1853
    %vm1898 = vcmp.eq.s32.totalorder %v56, 0
    %vm1899 = vcmp.eq.s32.totalorder %v56, 1
    %vm1900 = vcmp.eq.s32.totalorder %v56, 2
    %1902 = vset.pattern.permute.xlu0 0
    %1903 = vperm.xlu0 %1902, %v1852
    %v1904 = vpop.permute.xlu0 %1903
    %1907 = vset.pattern.permute.xlu0 0
    %1908 = vperm.xlu0 %1907, %v1853
    %v1909 = vpop.permute.xlu0 %1908
    %v1911 = vsel %vm1900, %v1904, 0.0
    %v1912 = vsel %vm1900, %v1909, 0.0
    %1914 = vset.pattern.permute.xlu0 0
    %1915 = vperm.xlu0 %1914, %v1896
    %v1916 = vpop.permute.xlu0 %1915
    %1919 = vset.pattern.permute.xlu0 0
    %1920 = vperm.xlu0 %1919, %v1897
    %v1921 = vpop.permute.xlu0 %1920
    %v1923 = vsel %vm1899, %v1916, %v1911
    %v1924 = vsel %vm1899, %v1921, %v1912
    %1926 = vset.pattern.permute.xlu0 32
    %1927 = vperm.xlu0 %1926, %v714
    %v1928 = vpop.permute.xlu0 %1927
    %1931 = vset.pattern.permute.xlu0 32
    %1932 = vperm.xlu0 %1931, %v716
    %v1933 = vpop.permute.xlu0 %1932
    %v1935 = vsel %vm1898, %v1928, %v1923
    %v1936 = vsel %vm1898, %v1933, %v1924
    %1937 = vst [vmem:[%s12] sm:$0xff] %v1935
    %1938 = vst [vmem:[%s12 + $0x8] sm:$0xff] %v1936
    // Predicated region
    $region42: #{forward.1} parent=1 // pred_check
      _
    $region43: #{forward.1} parent=1 // pred_check_branch
      %1940 = sbr.rel (0) target = $region45
    $region44: #{forward.1} parent=1 // pred_region
      %s1942 = ssub.s32 256, 256
      %1943 = vsyncadd [#allocation3], %s1942
      %s1944 = sshll.u32 [#allocation2], 4
      %s1945 = int_to_ptr.vmem [resolvable:$true] %s1944
      %1950 = dma.vmem_to_hbm [thread:$0]  %s1945, 256, %s10, [#allocation3], 128, 128, 8
    $region45: #{forward.1} parent=1 // pred_fallthru
      _
    // Predicated region
    $region46: #{forward.1} parent=1 // pred_check
      _
    $region47: #{forward.1} parent=1 // pred_check_branch
      %1952 = sbr.rel (0) target = $region49
    $region48: #{forward.1} parent=1 // pred_region
      %s1954 = ssub.s32 256, 256
      %1955 = vsyncadd [#allocation5], %s1954
      %s1956 = sshll.u32 [#allocation4], 4
      %s1957 = int_to_ptr.vmem [resolvable:$true] %s1956
      %1962 = dma.vmem_to_hbm [thread:$0]  %s1957, 256, %s11, [#allocation5], 128, 128, 8
    $region49: #{forward.1} parent=1 // pred_fallthru
      _
    // Predicated region
    $region50: #{forward.1} parent=1 // pred_check
      _
    $region51: #{forward.1} parent=1 // pred_check_branch
      %1964 = sbr.rel (0) target = $region53
    $region52: #{forward.1} parent=1 // pred_region
      _
    $region53: #{forward.1} parent=1 // pred_fallthru
      _
    // Predicated region
    $region54: #{forward.1} parent=1 // pred_check
      _
    $region55: #{forward.1} parent=1 // pred_check_branch
      %1966 = sbr.rel (0) target = $region57
    $region56: #{forward.1} parent=1 // pred_region
      %1967 = dma.done [#allocation3], 256
    $region57: #{forward.1} parent=1 // pred_fallthru
      _
    // Predicated region
    $region58: #{forward.1} parent=1 // pred_check
      _
    $region59: #{forward.1} parent=1 // pred_check_branch
      %1969 = sbr.rel (0) target = $region61
    $region60: #{forward.1} parent=1 // pred_region
      %1970 = dma.done [#allocation5], 256
    $region61: #{forward.1} parent=1 // pred_fallthru
      _
    // Predicated region
    $region62: #{forward.1} parent=1 // pred_check
      _
    $region63: #{forward.1} parent=1 // pred_check_branch
      %1972 = sbr.rel (0) target = $region65
    $region64: #{forward.1} parent=1 // pred_region
      _
    $region65: #{forward.1} parent=1 // pred_fallthru
      _
    %1973 = vsyncpa [#allocation3], 1
    %1974 = vsyncpa [#allocation5], 1

</llo_original>
